<compile_context>
chip_gen: v6e
topology: v6e:2x2x1
jax: 0.10.0
libtpu: 0.0.40
codegen_flags: <defaults>
</compile_context>

<pallas_src>
import jax
import jax.numpy as jnp
from jax.experimental import pallas as pl
from jax.experimental.pallas import tpu as pltpu

# ----------------------------- configuration -------------------------------
B = 2              # batch
H = W = 16         # input spatial size
C_IN = 3           # RGB input
C_STEM = 40        # efficientnet_b3 stem width (logical)
C_STEM_P = 128     # lane-dense padded stem width
C_HEAD = 1536      # efficientnet_b3 conv_head / pooled feature width
EMB = 512          # embedding_size
NUM_CLASSES = 16
NC_PAD = 128       # lane-dense padded class count (sliced back to 16 in the wrapper)
ARC_S = 30.0
ARC_M = 0.55       # margin m only used in the (unimplemented) training branch
BN_EPS = 1e-5
NORM_EPS = 1e-12   # F.normalize eps

STRIDE = 2
KSIZE = 3
HO = WO = H // STRIDE
HW = HO * WO                     # 64
BHW = B * HW                     # 128
K_IM2COL = KSIZE * KSIZE * C_IN  # 27
K_PAD = 32                       # padded contraction dim (sublane multiple)

TC_HEAD = 512                    # C_HEAD tile (grid axis); 1536 / 512 = 3 tiles
N_TILES = C_HEAD // TC_HEAD


# ------------------------------ Pallas kernel -------------------------------
def fused_forward_kernel(p_ref, ws_ref, bs_ref, wh_ref, bh_ref, pool_ref,
                         wn_ref, bn_ref, wa_ref, o_ref, stem_ref, acc_ref):
    """Grid axis k tiles C_HEAD. Per step: conv_head tile -> SiLU(bf16) -> GAP tile
    -> neck partial accumulate. Stem once at k==0, ArcFace epilogue at k==last."""
    k = pl.program_id(0)

    @pl.when(k == 0)
    def _init():
        # stem: im2col patches @ stem weight (bf16 operands, f32 acc), bias, SiLU
        x = jnp.dot(p_ref[...], ws_ref[...],
                    preferred_element_type=jnp.float32) + bs_ref[...]
        x = x * jax.nn.sigmoid(x)                         # (BHW, C_STEM_P) f32
        stem_ref[...] = x.astype(stem_ref.dtype)          # keep bf16 for head matmul
        acc_ref[...] = jnp.zeros_like(acc_ref)

    # ---- 1x1 conv_head tile: (BHW,128)bf16 @ (128,TC)bf16 -> f32, +bias ----
    y = jnp.dot(stem_ref[...], wh_ref[...],
                preferred_element_type=jnp.float32) + bh_ref[...]
    # SiLU + GAP in bf16 (bf16 EUP/VPU on v6e/v7x; safe pre-average activations)
    yb = y.astype(jnp.bfloat16)
    yb = yb * jax.nn.sigmoid(yb)                          # (BHW, TC) bf16

    # ---- global average pool via block-diagonal pooling matmul ----
    pooled = jnp.dot(pool_ref[...], yb,
                     preferred_element_type=jnp.float32)  # (B, TC) f32

    # ---- neck partial: accumulate over C_HEAD tiles (eval-BN folded on host) ----
    acc_ref[...] += jnp.dot(pooled.astype(wn_ref.dtype), wn_ref[...],
                            preferred_element_type=jnp.float32)   # (B, EMB) f32

    @pl.when(k == pl.num_programs(0) - 1)
    def _finalize():
        emb = jnp.maximum(acc_ref[...] + bn_ref[...], 0.0)         # ReLU
        inv_norm = jax.lax.rsqrt(
            jnp.maximum(jnp.sum(emb * emb, axis=-1, keepdims=True),
                        NORM_EPS * NORM_EPS))
        en = emb * inv_norm                                        # unit rows (f32)
        # ArcFace eval: s * (normalize(emb) @ normalize(W).T), lane-dense 128 cols
        o_ref[...] = ARC_S * jnp.dot(en, wa_ref[...],
                                     preferred_element_type=jnp.float32)


# ------------------------------- JAX glue -----------------------------------
def im2col_patches(x):
    """x: (B, H, W, C) NHWC -> (B*Ho*Wo, K_PAD) bf16, padded cols are exact zeros."""
    xp = jnp.pad(x, ((0, 0), (1, 1), (1, 1), (0, 0)))
    cols = []
    for i in range(KSIZE):
        for j in range(KSIZE):
            cols.append(xp[:, i:i + STRIDE * HO:STRIDE,
                           j:j + STRIDE * WO:STRIDE, :])
    p = jnp.concatenate(cols, axis=-1).reshape(BHW, K_IM2COL)
    out = jnp.zeros((BHW, K_PAD), jnp.float32).at[:, :K_IM2COL].set(p)
    return out.astype(jnp.bfloat16)


def init_params(key):
    """Logical (PyTorch-shaped) parameters."""
    ks = jax.random.split(key, 8)
    p = {}
    p["w_stem"] = 0.1 * jax.random.normal(ks[0], (K_IM2COL, C_STEM), jnp.float32)
    p["b_stem"] = jnp.zeros((1, C_STEM), jnp.float32)
    p["w_head"] = 0.05 * jax.random.normal(ks[1], (C_STEM, C_HEAD), jnp.float32)
    p["b_head"] = jnp.zeros((1, C_HEAD), jnp.float32)
    p["w_neck"] = 0.02 * jax.random.normal(ks[2], (C_HEAD, EMB), jnp.float32)
    p["b_neck"] = 0.01 * jax.random.normal(ks[3], (1, EMB), jnp.float32)
    p["bn_gamma"] = jnp.ones((1, EMB), jnp.float32)
    p["bn_beta"] = jnp.zeros((1, EMB), jnp.float32)
    p["bn_mean"] = 0.01 * jax.random.normal(ks[4], (1, EMB), jnp.float32)
    p["bn_var"] = jnp.abs(1.0 + 0.1 * jax.random.normal(ks[5], (1, EMB), jnp.float32))
    p["w_arc"] = 0.05 * jax.random.normal(ks[6], (NUM_CLASSES, EMB), jnp.float32)
    return p


def prepare_params(p):
    """One-time host-side folding: pad to tile-friendly shapes, fold eval-BN into
    the neck, pre-normalize / pad / transpose the ArcFace weight, cast MXU operands
    to bf16 (f32 accumulation happens in-kernel)."""
    f32, bf16 = jnp.float32, jnp.bfloat16
    # stem: pad contraction 27->32 and output width 40->128 with zeros, bf16 operand
    w_stem = (jnp.zeros((K_PAD, C_STEM_P), f32)
              .at[:K_IM2COL, :C_STEM].set(p["w_stem"])).astype(bf16)
    b_stem = jnp.zeros((1, C_STEM_P), f32).at[:, :C_STEM].set(p["b_stem"])
    # conv_head: pad input rows 40->128 (padded stem cols stay exactly 0 after SiLU)
    w_head = (jnp.zeros((C_STEM_P, C_HEAD), f32)
              .at[:C_STEM, :].set(p["w_head"])).astype(bf16)
    b_head = p["b_head"].astype(f32)
    # neck: fold eval BatchNorm1d (running stats) into weight/bias
    scale = p["bn_gamma"] * jax.lax.rsqrt(p["bn_var"] + BN_EPS)     # (1, EMB)
    w_neck = (p["w_neck"] * scale).astype(bf16)                     # (C_HEAD, EMB)
    b_neck = ((p["b_neck"] - p["bn_mean"]) * scale + p["bn_beta"]).astype(f32)
    # ArcFace: row-normalize (F.normalize eps semantics), pad classes 16->128, T
    w = p["w_arc"]
    wn = w * jax.lax.rsqrt(jnp.maximum(jnp.sum(w * w, axis=-1, keepdims=True),
                                       NORM_EPS * NORM_EPS))
    w_arc_t = (jnp.zeros((NC_PAD, EMB), f32).at[:NUM_CLASSES, :].set(wn)).T
    w_arc_t = jnp.asarray(w_arc_t, f32)                             # (EMB, NC_PAD)
    # block-diagonal pooling matrix: pool[b, b*HW:(b+1)*HW] = 1/HW (exact in bf16)
    pool = (jnp.repeat(jnp.eye(B, dtype=f32), HW, axis=1) / float(HW)).astype(bf16)
    return dict(w_stem=w_stem, b_stem=b_stem, w_head=w_head, b_head=b_head,
                pool=pool, w_neck=w_neck, b_neck=b_neck, w_arc_t=w_arc_t)


# Advisory cost for XLA scheduling around the custom call.
_FLOPS = 2 * (BHW * K_PAD * C_STEM_P          # stem
              + BHW * C_STEM_P * C_HEAD       # conv_head
              + B * BHW * C_HEAD              # GAP pooling matmul
              + B * C_HEAD * EMB              # neck
              + B * EMB * NC_PAD)             # ArcFace
_TRANS = BHW * C_STEM_P + BHW * C_HEAD        # two SiLU sigmoids
_BYTES = (BHW * K_PAD * 2 + K_PAD * C_STEM_P * 2 + C_STEM_P * 4
          + C_STEM_P * C_HEAD * 2 + C_HEAD * 4 + B * BHW * 2
          + C_HEAD * EMB * 2 + EMB * 4 + EMB * NC_PAD * 4 + B * NC_PAD * 4)


@jax.jit
def efficientnet_b3_arcface_forward(x_nchw, prep):
    # NCHW -> NHWC layout glue, then im2col for the stride-2 3x3 stem conv.
    x = jnp.transpose(x_nchw, (0, 2, 3, 1)).astype(jnp.float32)
    patches = im2col_patches(x)                                     # (BHW, 32) bf16

    grid_spec = pltpu.PrefetchScalarGridSpec(
        num_scalar_prefetch=0,
        grid=(N_TILES,),
        in_specs=[
            pl.BlockSpec((BHW, K_PAD), lambda k: (0, 0)),           # patches
            pl.BlockSpec((K_PAD, C_STEM_P), lambda k: (0, 0)),      # w_stem
            pl.BlockSpec((1, C_STEM_P), lambda k: (0, 0)),          # b_stem
            pl.BlockSpec((C_STEM_P, TC_HEAD), lambda k: (0, k)),    # w_head tile
            pl.BlockSpec((1, TC_HEAD), lambda k: (0, k)),           # b_head tile
            pl.BlockSpec((B, BHW), lambda k: (0, 0)),               # pool matrix
            pl.BlockSpec((TC_HEAD, EMB), lambda k: (k, 0)),         # w_neck tile
            pl.BlockSpec((1, EMB), lambda k: (0, 0)),               # b_neck (folded BN)
            pl.BlockSpec((EMB, NC_PAD), lambda k: (0, 0)),          # w_arc_t
        ],
        out_specs=pl.BlockSpec((B, NC_PAD), lambda k: (0, 0)),
        scratch_shapes=[
            pltpu.VMEM((BHW, C_STEM_P), jnp.bfloat16),   # stem activation (once)
            pltpu.VMEM((B, EMB), jnp.float32),           # neck accumulator
        ],
    )

    logits_pad = pl.pallas_call(
        fused_forward_kernel,
        out_shape=jax.ShapeDtypeStruct((B, NC_PAD), jnp.float32),
        grid_spec=grid_spec,
        compiler_params=pltpu.CompilerParams(
            dimension_semantics=("arbitrary",)),
        cost_estimate=pl.CostEstimate(
            flops=_FLOPS, transcendentals=_TRANS, bytes_accessed=_BYTES),
    )(patches, prep["w_stem"], prep["b_stem"], prep["w_head"], prep["b_head"],
      prep["pool"], prep["w_neck"], prep["b_neck"], prep["w_arc_t"])

    return logits_pad[:, :NUM_CLASSES]


# --------------------------------- main -------------------------------------
if __name__ == "__main__":
    key = jax.random.PRNGKey(0)
    kx, kp = jax.random.split(key)
    x_nchw = jax.random.normal(kx, (B, C_IN, H, W), jnp.float32)
    params = init_params(kp)
    prep = prepare_params(params)       # one-time host-side folding / padding

    out = efficientnet_b3_arcface_forward(x_nchw, prep)
    out = jax.block_until_ready(out)

    assert out.shape == (B, NUM_CLASSES)
    assert out.dtype == jnp.float32
    assert bool(jnp.all(jnp.isfinite(out)))
    # ArcFace eval logits are s * cos(theta), so bounded by |s|.
    assert bool(jnp.all(jnp.abs(out) <= ARC_S + 1e-3))
    print("KERNEL_OK")
</pallas_src>

<mosaic_0001>
module attributes {stable_mosaic.version = 11 : i64} {
  func.func @fused_forward_kernel(%arg0: i32, %arg1: memref<128x32xbf16, #tpu.memory_space<vmem>>, %arg2: memref<32x128xbf16, #tpu.memory_space<vmem>>, %arg3: memref<1x128xf32, #tpu.memory_space<vmem>>, %arg4: memref<128x512xbf16, #tpu.memory_space<vmem>>, %arg5: memref<1x512xf32, #tpu.memory_space<vmem>>, %arg6: memref<2x128xbf16, #tpu.memory_space<vmem>>, %arg7: memref<512x512xbf16, #tpu.memory_space<vmem>>, %arg8: memref<1x512xf32, #tpu.memory_space<vmem>>, %arg9: memref<512x128xf32, #tpu.memory_space<vmem>>, %arg10: memref<2x128xf32, #tpu.memory_space<vmem>>, %arg11: memref<128x128xbf16, #tpu.memory_space<vmem>>, %arg12: memref<2x512xf32, #tpu.memory_space<vmem>>) attributes {dimension_semantics = [#tpu.dimension_semantics<arbitrary>], iteration_bounds = array<i64: 3>, scalar_prefetch = 0 : i64, scratch_operands = 2 : i64, tpu.core_type = #tpu.core_type<tc>, window_params = [{pipeline_mode = #tpu.pipeline_mode<synchronous>, transform_indices = @transform_0, window_bounds = array<i64: 128, 32>}, {pipeline_mode = #tpu.pipeline_mode<synchronous>, transform_indices = @transform_1, window_bounds = array<i64: 32, 128>}, {pipeline_mode = #tpu.pipeline_mode<synchronous>, transform_indices = @transform_2, window_bounds = array<i64: 1, 128>}, {transform_indices = @transform_3, window_bounds = array<i64: 128, 512>}, {transform_indices = @transform_4, window_bounds = array<i64: 1, 512>}, {pipeline_mode = #tpu.pipeline_mode<synchronous>, transform_indices = @transform_5, window_bounds = array<i64: 2, 128>}, {transform_indices = @transform_6, window_bounds = array<i64: 512, 512>}, {pipeline_mode = #tpu.pipeline_mode<synchronous>, transform_indices = @transform_7, window_bounds = array<i64: 1, 512>}, {pipeline_mode = #tpu.pipeline_mode<synchronous>, transform_indices = @transform_8, window_bounds = array<i64: 512, 128>}, {pipeline_mode = #tpu.pipeline_mode<synchronous>, transform_indices = @transform_9, window_bounds = array<i64: 2, 128>}]} {
    %c0_i32 = arith.constant 0 : i32
    %0 = arith.cmpi eq, %arg0, %c0_i32 : i32
    %1 = arith.extui %0 : i1 to i32
    %c0_i32_0 = arith.constant 0 : i32
    %2 = arith.cmpi ne, %1, %c0_i32_0 : i32
    scf.if %2 {
      %c0_18 = arith.constant 0 : index
      %c0_19 = arith.constant 0 : index
      %27 = vector.load %arg1[%c0_18, %c0_19] : memref<128x32xbf16, #tpu.memory_space<vmem>>, vector<128x32xbf16>
      %c0_20 = arith.constant 0 : index
      %c0_21 = arith.constant 0 : index
      %28 = vector.load %arg2[%c0_20, %c0_21] : memref<32x128xbf16, #tpu.memory_space<vmem>>, vector<32x128xbf16>
      %cst_22 = arith.constant dense<0.000000e+00> : vector<128x128xf32>
      %29 = tpu.matmul %27, %28, %cst_22 {dimension_numbers = #tpu.dot_dimension_numbers<[1], [0], [0], [1], [0, 0, 1, 1], [], []>} : vector<128x32xbf16>, vector<32x128xbf16>, vector<128x128xf32> -> vector<128x128xf32>
      %c0_23 = arith.constant 0 : index
      %c0_24 = arith.constant 0 : index
      %30 = vector.load %arg3[%c0_23, %c0_24] : memref<1x128xf32, #tpu.memory_space<vmem>>, vector<1x128xf32>
      %31 = vector.broadcast %30 : vector<1x128xf32> to vector<128x128xf32>
      %32 = arith.addf %29, %31 : vector<128x128xf32>
      %33 = arith.negf %32 : vector<128x128xf32>
      %34 = math.exp %33 : vector<128x128xf32>
      %cst_25 = arith.constant 1.000000e+00 : f32
      %35 = vector.broadcast %cst_25 : f32 to vector<128x128xf32>
      %36 = arith.addf %35, %34 : vector<128x128xf32>
      %37 = arith.divf %35, %36 : vector<128x128xf32>
      %38 = arith.mulf %32, %37 : vector<128x128xf32>
      %39 = arith.truncf %38 : vector<128x128xf32> to vector<128x128xbf16>
      %c0_26 = arith.constant 0 : index
      %c0_27 = arith.constant 0 : index
      %40 = vector.load %arg11[%c0_26, %c0_27] : memref<128x128xbf16, #tpu.memory_space<vmem>>, vector<128x128xbf16>
      tpu.vector_store %arg11[%c0_26, %c0_27], %39 {strides = array<i32>} : memref<128x128xbf16, #tpu.memory_space<vmem>>, vector<128x128xbf16>,
      %cst_28 = arith.constant 0.000000e+00 : f32
      %41 = vector.broadcast %cst_28 : f32 to vector<2x512xf32>
      %c0_29 = arith.constant 0 : index
      %c0_30 = arith.constant 0 : index
      %42 = vector.load %arg12[%c0_29, %c0_30] : memref<2x512xf32, #tpu.memory_space<vmem>>, vector<2x512xf32>
      tpu.vector_store %arg12[%c0_29, %c0_30], %41 {strides = array<i32>} : memref<2x512xf32, #tpu.memory_space<vmem>>, vector<2x512xf32>,
    } else {
    }
    %c0 = arith.constant 0 : index
    %c0_1 = arith.constant 0 : index
    %3 = vector.load %arg11[%c0, %c0_1] : memref<128x128xbf16, #tpu.memory_space<vmem>>, vector<128x128xbf16>
    %c0_2 = arith.constant 0 : index
    %c0_3 = arith.constant 0 : index
    %4 = vector.load %arg4[%c0_2, %c0_3] : memref<128x512xbf16, #tpu.memory_space<vmem>>, vector<128x512xbf16>
    %cst = arith.constant dense<0.000000e+00> : vector<128x512xf32>
    %5 = tpu.matmul %3, %4, %cst {dimension_numbers = #tpu.dot_dimension_numbers<[1], [0], [0], [1], [0, 0, 1, 1], [], []>} : vector<128x128xbf16>, vector<128x512xbf16>, vector<128x512xf32> -> vector<128x512xf32>
    %c0_4 = arith.constant 0 : index
    %c0_5 = arith.constant 0 : index
    %6 = vector.load %arg5[%c0_4, %c0_5] : memref<1x512xf32, #tpu.memory_space<vmem>>, vector<1x512xf32>
    %7 = vector.broadcast %6 : vector<1x512xf32> to vector<128x512xf32>
    %8 = arith.addf %5, %7 : vector<128x512xf32>
    %9 = arith.truncf %8 : vector<128x512xf32> to vector<128x512xbf16>
    %10 = arith.negf %9 : vector<128x512xbf16>
    %11 = math.exp %10 : vector<128x512xbf16>
    %cst_6 = arith.constant 1.000000e+00 : bf16
    %12 = vector.broadcast %cst_6 : bf16 to vector<128x512xbf16>
    %13 = arith.addf %12, %11 : vector<128x512xbf16>
    %14 = arith.divf %12, %13 : vector<128x512xbf16>
    %15 = arith.mulf %9, %14 : vector<128x512xbf16>
    %c0_7 = arith.constant 0 : index
    %c0_8 = arith.constant 0 : index
    %16 = vector.load %arg6[%c0_7, %c0_8] : memref<2x128xbf16, #tpu.memory_space<vmem>>, vector<2x128xbf16>
    %cst_9 = arith.constant dense<0.000000e+00> : vector<2x512xf32>
    %17 = tpu.matmul %16, %15, %cst_9 {dimension_numbers = #tpu.dot_dimension_numbers<[1], [0], [0], [1], [0, 0, 1, 1], [], []>} : vector<2x128xbf16>, vector<128x512xbf16>, vector<2x512xf32> -> vector<2x512xf32>
    %c0_10 = arith.constant 0 : index
    %c0_11 = arith.constant 0 : index
    %18 = vector.load %arg12[%c0_10, %c0_11] : memref<2x512xf32, #tpu.memory_space<vmem>>, vector<2x512xf32>
    %19 = arith.truncf %17 : vector<2x512xf32> to vector<2x512xbf16>
    %c0_12 = arith.constant 0 : index
    %c0_13 = arith.constant 0 : index
    %20 = vector.load %arg7[%c0_12, %c0_13] : memref<512x512xbf16, #tpu.memory_space<vmem>>, vector<512x512xbf16>
    %cst_14 = arith.constant dense<0.000000e+00> : vector<2x512xf32>
    %21 = tpu.matmul %19, %20, %cst_14 {dimension_numbers = #tpu.dot_dimension_numbers<[1], [0], [0], [1], [0, 0, 1, 1], [], []>} : vector<2x512xbf16>, vector<512x512xbf16>, vector<2x512xf32> -> vector<2x512xf32>
    %22 = arith.addf %18, %21 : vector<2x512xf32>
    %c0_15 = arith.constant 0 : index
    %c0_16 = arith.constant 0 : index
    %23 = vector.load %arg12[%c0_15, %c0_16] : memref<2x512xf32, #tpu.memory_space<vmem>>, vector<2x512xf32>
    tpu.vector_store %arg12[%c0_15, %c0_16], %22 {strides = array<i32>} : memref<2x512xf32, #tpu.memory_space<vmem>>, vector<2x512xf32>,
    %c2_i32 = arith.constant 2 : i32
    %24 = arith.cmpi eq, %arg0, %c2_i32 : i32
    %25 = arith.extui %24 : i1 to i32
    %c0_i32_17 = arith.constant 0 : i32
    %26 = arith.cmpi ne, %25, %c0_i32_17 : i32
    scf.if %26 {
      %c0_18 = arith.constant 0 : index
      %c0_19 = arith.constant 0 : index
      %27 = vector.load %arg12[%c0_18, %c0_19] : memref<2x512xf32, #tpu.memory_space<vmem>>, vector<2x512xf32>
      %c0_20 = arith.constant 0 : index
      %c0_21 = arith.constant 0 : index
      %28 = vector.load %arg8[%c0_20, %c0_21] : memref<1x512xf32, #tpu.memory_space<vmem>>, vector<1x512xf32>
      %29 = vector.broadcast %28 : vector<1x512xf32> to vector<2x512xf32>
      %30 = arith.addf %27, %29 : vector<2x512xf32>
      %cst_22 = arith.constant 0.000000e+00 : f32
      %31 = vector.broadcast %cst_22 : f32 to vector<2x512xf32>
      %32 = arith.maximumf %30, %31 : vector<2x512xf32>
      %33 = arith.mulf %32, %32 : vector<2x512xf32>
      %cst_23 = arith.constant dense<0.000000e+00> : vector<2xf32>
      %34 = vector.multi_reduction <add>, %33, %cst_23 [1] : vector<2x512xf32> to vector<2xf32>
      %35 = vector.shape_cast %34 : vector<2xf32> to vector<2x1xf32>
      %cst_24 = arith.constant 1.000000e-24 : f32
      %36 = vector.broadcast %cst_24 : f32 to vector<2x1xf32>
      %37 = arith.maximumf %35, %36 : vector<2x1xf32>
      %38 = math.rsqrt %37 : vector<2x1xf32>
      %39 = vector.broadcast %38 : vector<2x1xf32> to vector<2x512xf32>
      %40 = arith.mulf %32, %39 : vector<2x512xf32>
      %c0_25 = arith.constant 0 : index
      %c0_26 = arith.constant 0 : index
      %41 = vector.load %arg9[%c0_25, %c0_26] : memref<512x128xf32, #tpu.memory_space<vmem>>, vector<512x128xf32>
      %cst_27 = arith.constant dense<0.000000e+00> : vector<2x128xf32>
      %42 = tpu.matmul %40, %41, %cst_27 {dimension_numbers = #tpu.dot_dimension_numbers<[1], [0], [0], [1], [0, 0, 1, 1], [], []>} : vector<2x512xf32>, vector<512x128xf32>, vector<2x128xf32> -> vector<2x128xf32>
      %cst_28 = arith.constant 3.000000e+01 : f32
      %43 = vector.broadcast %cst_28 : f32 to vector<2x128xf32>
      %44 = arith.mulf %43, %42 : vector<2x128xf32>
      %c0_29 = arith.constant 0 : index
      %c0_30 = arith.constant 0 : index
      %45 = vector.load %arg10[%c0_29, %c0_30] : memref<2x128xf32, #tpu.memory_space<vmem>>, vector<2x128xf32>
      tpu.vector_store %arg10[%c0_29, %c0_30], %44 {strides = array<i32>} : memref<2x128xf32, #tpu.memory_space<vmem>>, vector<2x128xf32>,
    } else {
    }
    return
  }
  func.func @transform_0(%arg0: i32) -> (i32, i32) {
    %c0_i32 = arith.constant 0 : i32
    %c0_i32_0 = arith.constant 0 : i32
    %c0_i32_1 = arith.constant 0 : i32
    return %c0_i32, %c0_i32_0 : i32, i32
  }
  func.func @transform_1(%arg0: i32) -> (i32, i32) {
    %c0_i32 = arith.constant 0 : i32
    %c0_i32_0 = arith.constant 0 : i32
    %c0_i32_1 = arith.constant 0 : i32
    return %c0_i32, %c0_i32_0 : i32, i32
  }
  func.func @transform_2(%arg0: i32) -> (i32, i32) {
    %c0_i32 = arith.constant 0 : i32
    %c0_i32_0 = arith.constant 0 : i32
    %c0_i32_1 = arith.constant 0 : i32
    return %c0_i32, %c0_i32_0 : i32, i32
  }
  func.func @transform_3(%arg0: i32) -> (i32, i32) {
    %c0_i32 = arith.constant 0 : i32
    %c0_i32_0 = arith.constant 0 : i32
    return %c0_i32, %arg0 : i32, i32
  }
  func.func @transform_4(%arg0: i32) -> (i32, i32) {
    %c0_i32 = arith.constant 0 : i32
    %c0_i32_0 = arith.constant 0 : i32
    return %c0_i32, %arg0 : i32, i32
  }
  func.func @transform_5(%arg0: i32) -> (i32, i32) {
    %c0_i32 = arith.constant 0 : i32
    %c0_i32_0 = arith.constant 0 : i32
    %c0_i32_1 = arith.constant 0 : i32
    return %c0_i32, %c0_i32_0 : i32, i32
  }
  func.func @transform_6(%arg0: i32) -> (i32, i32) {
    %c0_i32 = arith.constant 0 : i32
    %c0_i32_0 = arith.constant 0 : i32
    return %arg0, %c0_i32 : i32, i32
  }
  func.func @transform_7(%arg0: i32) -> (i32, i32) {
    %c0_i32 = arith.constant 0 : i32
    %c0_i32_0 = arith.constant 0 : i32
    %c0_i32_1 = arith.constant 0 : i32
    return %c0_i32, %c0_i32_0 : i32, i32
  }
  func.func @transform_8(%arg0: i32) -> (i32, i32) {
    %c0_i32 = arith.constant 0 : i32
    %c0_i32_0 = arith.constant 0 : i32
    %c0_i32_1 = arith.constant 0 : i32
    return %c0_i32, %c0_i32_0 : i32, i32
  }
  func.func @transform_9(%arg0: i32) -> (i32, i32) {
    %c0_i32 = arith.constant 0 : i32
    %c0_i32_0 = arith.constant 0 : i32
    %c0_i32_1 = arith.constant 0 : i32
    return %c0_i32, %c0_i32_0 : i32, i32
  }
}

</mosaic_0001>

<llo_original>
// kernel: efficientnet_b3_arcface_forward.1
$region0: #{efficientnet_b3_arcface_forward.1}
  #allocation0 [shape = 'u32[]', space=smem, size = 0x4, offset = 0x4, fixed_abs, tag = 'smem constant byte address 0x4 - core index']
  #allocation1 [shape = 'u32[144,128]{1,0:T(1,128)}', space=vmem, size = 0x12000, scoped, tag = 'internal scratch']
  #allocation2 [shape = 'bf16[128,128]{1,0:T(8,128)(2,1)}', space=vmem, size = 0x8000, scoped, tag = 'scratch operand']
  #allocation3 [shape = 'f32[2,512]{1,0:T(2,128)}', space=vmem, size = 0x1000, scoped, tag = 'scratch operand']
  %s0 = inlined_call_operand.vmem [shape: bf16[128,32], index: 0, kind: input, shape index: {}]
  %s1 = inlined_call_operand.vmem [shape: bf16[32,128], index: 1, kind: input, shape index: {}]
  %s2 = inlined_call_operand.vmem [shape: f32[1,128], index: 2, kind: input, shape index: {}]
  %s3 = inlined_call_operand.hbm [shape: bf16[128,1536], index: 3, kind: input, shape index: {}]
  %s4 = inlined_call_operand.vmem [shape: f32[1,1536], index: 4, kind: input, shape index: {}]
  %s5 = inlined_call_operand.vmem [shape: bf16[2,128], index: 5, kind: input, shape index: {}]
  %s6 = inlined_call_operand.vmem [shape: bf16[1536,512], index: 6, kind: input, shape index: {}]
  %s7 = inlined_call_operand.vmem [shape: f32[1,512], index: 7, kind: input, shape index: {}]
  %s8 = inlined_call_operand.hbm [shape: f32[512,128], index: 8, kind: input, shape index: {}]
  %s9 = inlined_call_operand.hbm [shape: f32[2,128], index: 9, kind: output, shape index: {}]
  %s10 = sld [smem:[#allocation0]]
  $region85: #{efficientnet_b3_arcface_forward.1} parent=0
    _
  %s12 = ssub.s32 1, %s10
  %s13 = scalar_select 0, %s12, %s10
  $region1: #{efficientnet_b3_arcface_forward.1} parent=0
    #allocation4 [shape = 'u8[262144]{0}', space=vmem, size = 0x40000, scoped, tag = 'input window, operand 3']
    #allocation5 [shape = 's32[2]{0}', space=sflag, size = 0x8, scoped, tag = 'scoped memory for efficientnet_b3_arcface_forward.1']
    #allocation6 [shape = 's32[2]{0}', space=sflag, size = 0x8, scoped, tag = 'scoped memory for efficientnet_b3_arcface_forward.1']
    #allocation7 [shape = 'u8[262144]{0}', space=vmem, size = 0x40000, scoped, tag = 'input window, operand 8, single buffered']
    #allocation8 [shape = 's32[1]{0}', space=sflag, size = 0x4, scoped, tag = 'scoped memory for efficientnet_b3_arcface_forward.1']
    #allocation9 [shape = 'u8[1024]{0}', space=vmem, size = 0x400, scoped, tag = 'output window, operand 0, single buffered']
    %14 = vsyncpa [#allocation5], 0
    %s15 = scalar_lea.sflag [#allocation5], 1
    %16 = vsyncpa %s15, 0
    %17 = vsyncpa [#allocation8], 0
    %18 = vsyncpa [#allocation6], 0
    loop: start=0, step=1, limit=5
    $region2: #{efficientnet_b3_arcface_forward.1} parent=1 // loop_pre_header
      _
    $region3: #{efficientnet_b3_arcface_forward.1} parent=1 // loop_header
      %s20 = sphi 0, %s24
      %p21 = scmp.ge.s32.totalorder %s20, 5
      %s28 = sphi 0, %s28
      %s30 = sphi 0, %s28
      %s31 = sphi 0, %s30
      %s45 = sphi 0, %s31
      %s49 = sphi 0, %s49
      %s51 = sphi 0, %s49
      %s52 = sphi 0, %s51
      %s66 = sphi 0, %s52
      %s70 = sphi 0, %s70
      %s72 = sphi 0, %s70
      %s73 = sphi 0, %s72
      %s87 = sphi 0, %s73
      %s93 = sphi 0, %s95
      %s96 = sphi 0, %s93
      %s97 = sphi 0, %s96
      %s113 = sphi 0, %s97
      %s119 = sphi 0, %s121
      %s122 = sphi 0, %s119
      %s123 = sphi 0, %s122
      %s139 = sphi 0, %s123
      %s143 = sphi 0, %s143
      %s145 = sphi 0, %s143
      %s146 = sphi 0, %s145
      %s160 = sphi 0, %s146
      %s166 = sphi 0, %s168
      %s169 = sphi 0, %s166
      %s170 = sphi 0, %s169
      %s186 = sphi 0, %s170
      %s190 = sphi 0, %s190
      %s192 = sphi 0, %s190
      %s193 = sphi 0, %s192
      %s207 = sphi 0, %s193
      %s211 = sphi 0, %s211
      %s213 = sphi 0, %s211
      %s214 = sphi 0, %s213
      %s228 = sphi 0, %s214
      %s232 = sphi 0, %s232
      %s234 = sphi 0, %s232
      %s235 = sphi 0, %s234
      %s249 = sphi 0, %s235
    $region4: #{efficientnet_b3_arcface_forward.1} parent=1 // loop_header_branch
      %23 = sbr.rel (%p21) target = $region8
    $region5: #{efficientnet_b3_arcface_forward.1} parent=1 // loop_body
      %s25 = ssub.s32 %s20, 1
      %s26 = ssub.s32 %s20, 2
      %s27 = sadd.s32 %s20, 1
      %s29 = sadd.s32 %s28, 1
      %p32 = scmp.eq.s32.totalorder %s20, 2
      %p33 = scmp.ne.s32.totalorder %s28, %s30
      %p34 = scmp.eq.s32.totalorder %s20, 0
      %p35 = por %p33, %p34
      %p36 = scmp.ne.s32.totalorder %s28, %s30
      %p37 = scmp.eq.s32.totalorder %s25, 2
      %p38 = por %p36, %p37
      %p39 = scmp.ne.s32.totalorder %s30, %s31
      %p40 = scmp.eq.s32.totalorder %s25, 0
      %p41 = por %p39, %p40
      %p42 = scmp.ne.s32.totalorder %s30, %s31
      %p43 = scmp.eq.s32.totalorder %s26, 2
      %p44 = por %p42, %p43
      %p46 = scmp.ne.s32.totalorder %s31, %s45
      %p47 = scmp.eq.s32.totalorder %s26, 0
      %p48 = por %p46, %p47
      %s50 = sadd.s32 %s49, 1
      %p53 = scmp.eq.s32.totalorder %s20, 2
      %p54 = scmp.ne.s32.totalorder %s49, %s51
      %p55 = scmp.eq.s32.totalorder %s20, 0
      %p56 = por %p54, %p55
      %p57 = scmp.ne.s32.totalorder %s49, %s51
      %p58 = scmp.eq.s32.totalorder %s25, 2
      %p59 = por %p57, %p58
      %p60 = scmp.ne.s32.totalorder %s51, %s52
      %p61 = scmp.eq.s32.totalorder %s25, 0
      %p62 = por %p60, %p61
      %p63 = scmp.ne.s32.totalorder %s51, %s52
      %p64 = scmp.eq.s32.totalorder %s26, 2
      %p65 = por %p63, %p64
      %p67 = scmp.ne.s32.totalorder %s52, %s66
      %p68 = scmp.eq.s32.totalorder %s26, 0
      %p69 = por %p67, %p68
      %s71 = sadd.s32 %s70, 1
      %p74 = scmp.eq.s32.totalorder %s20, 2
      %p75 = scmp.ne.s32.totalorder %s70, %s72
      %p76 = scmp.eq.s32.totalorder %s20, 0
      %p77 = por %p75, %p76
      %p78 = scmp.ne.s32.totalorder %s70, %s72
      %p79 = scmp.eq.s32.totalorder %s25, 2
      %p80 = por %p78, %p79
      %p81 = scmp.ne.s32.totalorder %s72, %s73
      %p82 = scmp.eq.s32.totalorder %s25, 0
      %p83 = por %p81, %p82
      %p84 = scmp.ne.s32.totalorder %s72, %s73
      %p85 = scmp.eq.s32.totalorder %s26, 2
      %p86 = por %p84, %p85
      %p88 = scmp.ne.s32.totalorder %s73, %s87
      %p89 = scmp.eq.s32.totalorder %s26, 0
      %p90 = por %p88, %p89
      %s91 = ssub.s32 %s20, %s27
      %p92 = scmp.eq.s32.totalorder %s91, 0
      %s94 = sadd.s32 %s93, 1
      %s95 = scalar_select %p92, %s93, %s94
      %p98 = pneg %p92
      %p99 = scmp.eq.s32.totalorder %s20, 2
      %p100 = por %p98, %p99
      %p101 = scmp.ne.s32.totalorder %s93, %s96
      %p102 = scmp.eq.s32.totalorder %s20, 0
      %p103 = por %p101, %p102
      %p104 = scmp.ne.s32.totalorder %s93, %s96
      %p105 = scmp.eq.s32.totalorder %s25, 2
      %p106 = por %p104, %p105
      %p107 = scmp.ne.s32.totalorder %s96, %s97
      %p108 = scmp.eq.s32.totalorder %s25, 0
      %p109 = por %p107, %p108
      %p110 = scmp.ne.s32.totalorder %s96, %s97
      %p111 = scmp.eq.s32.totalorder %s26, 2
      %p112 = por %p110, %p111
      %p114 = scmp.ne.s32.totalorder %s97, %s113
      %p115 = scmp.eq.s32.totalorder %s26, 0
      %p116 = por %p114, %p115
      %s117 = ssub.s32 %s20, %s27
      %p118 = scmp.eq.s32.totalorder %s117, 0
      %s120 = sadd.s32 %s119, 1
      %s121 = scalar_select %p118, %s119, %s120
      %p124 = pneg %p118
      %p125 = scmp.eq.s32.totalorder %s20, 2
      %p126 = por %p124, %p125
      %p127 = scmp.ne.s32.totalorder %s119, %s122
      %p128 = scmp.eq.s32.totalorder %s20, 0
      %p129 = por %p127, %p128
      %p130 = scmp.ne.s32.totalorder %s119, %s122
      %p131 = scmp.eq.s32.totalorder %s25, 2
      %p132 = por %p130, %p131
      %p133 = scmp.ne.s32.totalorder %s122, %s123
      %p134 = scmp.eq.s32.totalorder %s25, 0
      %p135 = por %p133, %p134
      %p136 = scmp.ne.s32.totalorder %s122, %s123
      %p137 = scmp.eq.s32.totalorder %s26, 2
      %p138 = por %p136, %p137
      %p140 = scmp.ne.s32.totalorder %s123, %s139
      %p141 = scmp.eq.s32.totalorder %s26, 0
      %p142 = por %p140, %p141
      %s144 = sadd.s32 %s143, 1
      %p147 = scmp.eq.s32.totalorder %s20, 2
      %p148 = scmp.ne.s32.totalorder %s143, %s145
      %p149 = scmp.eq.s32.totalorder %s20, 0
      %p150 = por %p148, %p149
      %p151 = scmp.ne.s32.totalorder %s143, %s145
      %p152 = scmp.eq.s32.totalorder %s25, 2
      %p153 = por %p151, %p152
      %p154 = scmp.ne.s32.totalorder %s145, %s146
      %p155 = scmp.eq.s32.totalorder %s25, 0
      %p156 = por %p154, %p155
      %p157 = scmp.ne.s32.totalorder %s145, %s146
      %p158 = scmp.eq.s32.totalorder %s26, 2
      %p159 = por %p157, %p158
      %p161 = scmp.ne.s32.totalorder %s146, %s160
      %p162 = scmp.eq.s32.totalorder %s26, 0
      %p163 = por %p161, %p162
      %s164 = ssub.s32 %s20, %s27
      %p165 = scmp.eq.s32.totalorder %s164, 0
      %s167 = sadd.s32 %s166, 1
      %s168 = scalar_select %p165, %s166, %s167
      %p171 = pneg %p165
      %p172 = scmp.eq.s32.totalorder %s20, 2
      %p173 = por %p171, %p172
      %p174 = scmp.ne.s32.totalorder %s166, %s169
      %p175 = scmp.eq.s32.totalorder %s20, 0
      %p176 = por %p174, %p175
      %p177 = scmp.ne.s32.totalorder %s166, %s169
      %p178 = scmp.eq.s32.totalorder %s25, 2
      %p179 = por %p177, %p178
      %p180 = scmp.ne.s32.totalorder %s169, %s170
      %p181 = scmp.eq.s32.totalorder %s25, 0
      %p182 = por %p180, %p181
      %p183 = scmp.ne.s32.totalorder %s169, %s170
      %p184 = scmp.eq.s32.totalorder %s26, 2
      %p185 = por %p183, %p184
      %p187 = scmp.ne.s32.totalorder %s170, %s186
      %p188 = scmp.eq.s32.totalorder %s26, 0
      %p189 = por %p187, %p188
      %s191 = sadd.s32 %s190, 1
      %p194 = scmp.eq.s32.totalorder %s20, 2
      %p195 = scmp.ne.s32.totalorder %s190, %s192
      %p196 = scmp.eq.s32.totalorder %s20, 0
      %p197 = por %p195, %p196
      %p198 = scmp.ne.s32.totalorder %s190, %s192
      %p199 = scmp.eq.s32.totalorder %s25, 2
      %p200 = por %p198, %p199
      %p201 = scmp.ne.s32.totalorder %s192, %s193
      %p202 = scmp.eq.s32.totalorder %s25, 0
      %p203 = por %p201, %p202
      %p204 = scmp.ne.s32.totalorder %s192, %s193
      %p205 = scmp.eq.s32.totalorder %s26, 2
      %p206 = por %p204, %p205
      %p208 = scmp.ne.s32.totalorder %s193, %s207
      %p209 = scmp.eq.s32.totalorder %s26, 0
      %p210 = por %p208, %p209
      %s212 = sadd.s32 %s211, 1
      %p215 = scmp.eq.s32.totalorder %s20, 2
      %p216 = scmp.ne.s32.totalorder %s211, %s213
      %p217 = scmp.eq.s32.totalorder %s20, 0
      %p218 = por %p216, %p217
      %p219 = scmp.ne.s32.totalorder %s211, %s213
      %p220 = scmp.eq.s32.totalorder %s25, 2
      %p221 = por %p219, %p220
      %p222 = scmp.ne.s32.totalorder %s213, %s214
      %p223 = scmp.eq.s32.totalorder %s25, 0
      %p224 = por %p222, %p223
      %p225 = scmp.ne.s32.totalorder %s213, %s214
      %p226 = scmp.eq.s32.totalorder %s26, 2
      %p227 = por %p225, %p226
      %p229 = scmp.ne.s32.totalorder %s214, %s228
      %p230 = scmp.eq.s32.totalorder %s26, 0
      %p231 = por %p229, %p230
      %s233 = sadd.s32 %s232, 1
      %p236 = scmp.eq.s32.totalorder %s20, 2
      %p237 = scmp.ne.s32.totalorder %s232, %s234
      %p238 = scmp.eq.s32.totalorder %s20, 0
      %p239 = por %p237, %p238
      %p240 = scmp.ne.s32.totalorder %s232, %s234
      %p241 = scmp.eq.s32.totalorder %s25, 2
      %p242 = por %p240, %p241
      %p243 = scmp.ne.s32.totalorder %s234, %s235
      %p244 = scmp.eq.s32.totalorder %s25, 0
      %p245 = por %p243, %p244
      %p246 = scmp.ne.s32.totalorder %s234, %s235
      %p247 = scmp.eq.s32.totalorder %s26, 2
      %p248 = por %p246, %p247
      %p250 = scmp.ne.s32.totalorder %s235, %s249
      %p251 = scmp.eq.s32.totalorder %s26, 0
      %p252 = por %p250, %p251
      %p253 = scmp.le.s32.totalorder 1, %s20
      %p254 = scmp.lt.s32.totalorder %s20, 4
      %p255 = pnand %p253, %p254
      %p256 = pneg %p255
      // Predicated region
      $region9: #{efficientnet_b3_arcface_forward.1} parent=5 // pred_check
        _
      $region10: #{efficientnet_b3_arcface_forward.1} parent=5 // pred_check_branch
        %258 = sbr.rel (%p255) target = $region12
      $region11: #{efficientnet_b3_arcface_forward.1} parent=5 // pred_region
        %s259 = ssub.s32 %s20, 1
        // Predicated region
        $region13: #{efficientnet_b3_arcface_forward.1} parent=11 // pred_check
          %p260 = pneg %p41
        $region14: #{efficientnet_b3_arcface_forward.1} parent=11 // pred_check_branch
          %262 = sbr.rel (%p260) target = $region16
        $region15: #{efficientnet_b3_arcface_forward.1} parent=11 // pred_region
          _
        $region16: #{efficientnet_b3_arcface_forward.1} parent=11 // pred_fallthru
          _
        // Predicated region
        $region17: #{efficientnet_b3_arcface_forward.1} parent=11 // pred_check
          %p263 = pneg %p62
        $region18: #{efficientnet_b3_arcface_forward.1} parent=11 // pred_check_branch
          %265 = sbr.rel (%p263) target = $region20
        $region19: #{efficientnet_b3_arcface_forward.1} parent=11 // pred_region
          _
        $region20: #{efficientnet_b3_arcface_forward.1} parent=11 // pred_fallthru
          _
        // Predicated region
        $region21: #{efficientnet_b3_arcface_forward.1} parent=11 // pred_check
          %p266 = pneg %p83
        $region22: #{efficientnet_b3_arcface_forward.1} parent=11 // pred_check_branch
          %268 = sbr.rel (%p266) target = $region24
        $region23: #{efficientnet_b3_arcface_forward.1} parent=11 // pred_region
          _
        $region24: #{efficientnet_b3_arcface_forward.1} parent=11 // pred_fallthru
          _
        // Predicated region
        $region25: #{efficientnet_b3_arcface_forward.1} parent=11 // pred_check
          %p269 = pneg %p156
        $region26: #{efficientnet_b3_arcface_forward.1} parent=11 // pred_check_branch
          %271 = sbr.rel (%p269) target = $region28
        $region27: #{efficientnet_b3_arcface_forward.1} parent=11 // pred_region
          _
        $region28: #{efficientnet_b3_arcface_forward.1} parent=11 // pred_fallthru
          _
        // Predicated region
        $region29: #{efficientnet_b3_arcface_forward.1} parent=11 // pred_check
          %p272 = pneg %p203
        $region30: #{efficientnet_b3_arcface_forward.1} parent=11 // pred_check_branch
          %274 = sbr.rel (%p272) target = $region32
        $region31: #{efficientnet_b3_arcface_forward.1} parent=11 // pred_region
          _
        $region32: #{efficientnet_b3_arcface_forward.1} parent=11 // pred_fallthru
          _
        // Predicated region
        $region33: #{efficientnet_b3_arcface_forward.1} parent=11 // pred_check
          %p275 = pneg %p224
        $region34: #{efficientnet_b3_arcface_forward.1} parent=11 // pred_check_branch
          %277 = sbr.rel (%p275) target = $region36
        $region35: #{efficientnet_b3_arcface_forward.1} parent=11 // pred_region
          %s279 = ssub.s32 8192, 8192
          %280 = vsyncadd [#allocation8], %s279
          %s281 = sshll.u32 [#allocation7], 4
          %s282 = int_to_ptr.vmem [resolvable:$true] %s281
          %287 = dma.hbm_to_vmem [thread:$0]  %s8, 8192, %s282, [#allocation8], 128, 128, 8
        $region36: #{efficientnet_b3_arcface_forward.1} parent=11 // pred_fallthru
          _
      $region12: #{efficientnet_b3_arcface_forward.1} parent=5 // pred_fallthru
        _
      %p288 = scmp.lt.s32.totalorder %s20, 3
      // Predicated region
      $region37: #{efficientnet_b3_arcface_forward.1} parent=5 // pred_check
        %p289 = pneg %p288
      $region38: #{efficientnet_b3_arcface_forward.1} parent=5 // pred_check_branch
        %291 = sbr.rel (%p289) target = $region40
      $region39: #{efficientnet_b3_arcface_forward.1} parent=5 // pred_region
        // Predicated region
        $region41: #{efficientnet_b3_arcface_forward.1} parent=39 // pred_check
          %p292 = pneg %p103
        $region42: #{efficientnet_b3_arcface_forward.1} parent=39 // pred_check_branch
          %294 = sbr.rel (%p292) target = $region44
        $region43: #{efficientnet_b3_arcface_forward.1} parent=39 // pred_region
          %s295 = sand.u32 %s93, 1
          %s296 = scalar_lea.sflag [#allocation5], %s295
          %s297 = sand.u32 %s93, 1
          %s298 = smul.addr %s297, 256
          %s299 = scalar_lea.vmem [#allocation4], %s298
          %s300 = smul.u32 4, %s20
          %s302 = ssub.s32 4096, 4096
          %303 = vsyncadd %s296, %s302
          %s304 = smul.addr %s300, 64
          %s305 = scalar_lea.hbm %s3, %s304
          %s306 = sshll.u32 %s299, 4
          %s307 = int_to_ptr.vmem [resolvable:$true] %s306
          %312 = dma.hbm_to_vmem [thread:$0]  %s305, 4096, %s307, %s296, 768, 256, 16
        $region44: #{efficientnet_b3_arcface_forward.1} parent=39 // pred_fallthru
          _
        // Predicated region
        $region45: #{efficientnet_b3_arcface_forward.1} parent=39 // pred_check
          %p313 = pneg %p129
        $region46: #{efficientnet_b3_arcface_forward.1} parent=39 // pred_check_branch
          %315 = sbr.rel (%p313) target = $region48
        $region47: #{efficientnet_b3_arcface_forward.1} parent=39 // pred_region
          %s316 = smul.u32 4, %s20
          %p317 = scmp.lt.s32.totalorder %s316, 11
          %s318 = scalar_select %p317, %s316, 11
          %s319 = scalar_lea.vmem %s4, %s318
          %s320 = smul.u32 4, %s20
        $region48: #{efficientnet_b3_arcface_forward.1} parent=39 // pred_fallthru
          _
        // Predicated region
        $region49: #{efficientnet_b3_arcface_forward.1} parent=39 // pred_check
          %p321 = pneg %p176
        $region50: #{efficientnet_b3_arcface_forward.1} parent=39 // pred_check_branch
          %323 = sbr.rel (%p321) target = $region52
        $region51: #{efficientnet_b3_arcface_forward.1} parent=39 // pred_region
          %s324 = smul.u32 64, %s20
          %p325 = scmp.lt.s32.totalorder %s324, 191
          %s326 = scalar_select %p325, %s324, 191
          %s327 = smul.addr %s326, 4
          %s328 = smul.addr %s327, 4
          %s329 = scalar_lea.vmem %s6, %s328
          %s330 = smul.u32 64, %s20
        $region52: #{efficientnet_b3_arcface_forward.1} parent=39 // pred_fallthru
          _
      $region40: #{efficientnet_b3_arcface_forward.1} parent=5 // pred_fallthru
        _
      %p331 = scmp.le.s32.totalorder 1, %s20
      %p332 = scmp.lt.s32.totalorder %s20, 4
      %p333 = pnand %p331, %p332
      %p334 = pneg %p333
      // Predicated region
      $region53: #{efficientnet_b3_arcface_forward.1} parent=5 // pred_check
        _
      $region54: #{efficientnet_b3_arcface_forward.1} parent=5 // pred_check_branch
        %336 = sbr.rel (%p333) target = $region56
      $region55: #{efficientnet_b3_arcface_forward.1} parent=5 // pred_region
        %s337 = ssub.s32 %s20, 1
        %s338 = sand.u32 %s96, 1
        %s339 = scalar_lea.sflag [#allocation5], %s338
        %s340 = sand.u32 %s96, 1
        %s341 = smul.addr %s340, 256
        %s342 = scalar_lea.vmem [#allocation4], %s341
        // Predicated region
        $region57: #{efficientnet_b3_arcface_forward.1} parent=55 // pred_check
          %p343 = pneg %p109
        $region58: #{efficientnet_b3_arcface_forward.1} parent=55 // pred_check_branch
          %345 = sbr.rel (%p343) target = $region60
        $region59: #{efficientnet_b3_arcface_forward.1} parent=55 // pred_region
          %346 = dma.done %s339, 4096
        $region60: #{efficientnet_b3_arcface_forward.1} parent=55 // pred_fallthru
          _
        // Predicated region
        $region61: #{efficientnet_b3_arcface_forward.1} parent=55 // pred_check
          %p347 = pneg %p224
        $region62: #{efficientnet_b3_arcface_forward.1} parent=55 // pred_check_branch
          %349 = sbr.rel (%p347) target = $region64
        $region63: #{efficientnet_b3_arcface_forward.1} parent=55 // pred_region
          %350 = dma.done [#allocation8], 8192
        $region64: #{efficientnet_b3_arcface_forward.1} parent=55 // pred_fallthru
          _
        %p351 = pneg %p41
        %p352 = pneg %p38
        %p353 = pneg %p62
        %p354 = pneg %p59
        %p355 = pneg %p83
        %p356 = pneg %p80
        %s357 = sand.u32 %s96, 1
        %s358 = scalar_lea.sflag [#allocation5], %s357
        %s359 = sand.u32 %s96, 1
        %s360 = smul.addr %s359, 256
        %s361 = scalar_lea.vmem [#allocation4], %s360
        %p362 = pneg %p109
        %p363 = pneg %p106
        %s364 = smul.u32 4, %s25
        %p365 = scmp.lt.s32.totalorder %s364, 11
        %s366 = scalar_select %p365, %s364, 11
        %s367 = scalar_lea.vmem %s4, %s366
        %p368 = pneg %p135
        %p369 = pneg %p132
        %p370 = pneg %p156
        %p371 = pneg %p153
        %s372 = smul.u32 64, %s25
        %p373 = scmp.lt.s32.totalorder %s372, 191
        %s374 = scalar_select %p373, %s372, 191
        %s375 = smul.addr %s374, 4
        %s376 = smul.addr %s375, 4
        %s377 = scalar_lea.vmem %s6, %s376
        %p378 = pneg %p182
        %p379 = pneg %p179
        %p380 = pneg %p203
        %p381 = pneg %p200
        %p382 = pneg %p224
        %p383 = pneg %p221
        %p384 = pneg %p245
        %p385 = pneg %p242
        %s386 = smul.u32 4, %s25
        %s387 = smul.u32 4, %s25
        %p388 = scmp.lt.s32.totalorder %s387, 11
        %s389 = scalar_select %p388, %s387, 11
        %s390 = scalar_lea.vmem %s4, %s389
        %s391 = smul.u32 4, %s25
        %s392 = smul.u32 64, %s25
        %p393 = scmp.lt.s32.totalorder %s392, 191
        %s394 = scalar_select %p393, %s392, 191
        %s395 = smul.addr %s394, 4
        %s396 = smul.addr %s395, 4
        %s397 = scalar_lea.vmem %s6, %s396
        %s398 = smul.u32 64, %s25
        %p401 = scmp.eq.s32.totalorder %s25, 0
        // Predicated region
        $region65: #{efficientnet_b3_arcface_forward.1} parent=55 // pred_check
          %p402 = pneg %p401
        $region66: #{efficientnet_b3_arcface_forward.1} parent=55 // pred_check_branch
          %404 = sbr.rel (%p402) target = $region68
        $region67: #{efficientnet_b3_arcface_forward.1} parent=55 // pred_region
          %v405 = vld [vmem:[%s0] sm:$0xf]
          %v406 = vld [vmem:[%s0 + $0x4] sm:$0xf]
          %v407 = vld [vmem:[%s0 + $0x8] sm:$0xf]
          %v408 = vld [vmem:[%s0 + $0xc] sm:$0xf]
          %v409 = vld [vmem:[%s0 + $0x10] sm:$0xf]
          %v410 = vld [vmem:[%s0 + $0x14] sm:$0xf]
          %v411 = vld [vmem:[%s0 + $0x18] sm:$0xf]
          %v412 = vld [vmem:[%s0 + $0x1c] sm:$0xf]
          %v413 = vld [vmem:[%s0 + $0x20] sm:$0xf]
          %v414 = vld [vmem:[%s0 + $0x24] sm:$0xf]
          %v415 = vld [vmem:[%s0 + $0x28] sm:$0xf]
          %v416 = vld [vmem:[%s0 + $0x2c] sm:$0xf]
          %v417 = vld [vmem:[%s0 + $0x30] sm:$0xf]
          %v418 = vld [vmem:[%s0 + $0x34] sm:$0xf]
          %v419 = vld [vmem:[%s0 + $0x38] sm:$0xf]
          %v420 = vld [vmem:[%s0 + $0x3c] sm:$0xf]
          %v421 = vld [vmem:[%s1] sm:$0xf]
          %v422 = vld [vmem:[%s1 + $0x4] sm:$0xf]
          %v423 = vld [vmem:[%s1 + $0x8] sm:$0xf]
          %v424 = vld [vmem:[%s1 + $0xc] sm:$0xf]
          %v425 = vld [vmem:[%s2] sm:$0x1]
          %v427 = vlaneseq
          %v428 = vshrl.u32 %v427, 7
          %v429 = vsub.s32 0, %v428
          %v430 = vrot.slane %v425, %v429
          %v448 = vunpack.c.l.b16 %v405
          %v449 = vunpack.c.l.b16 %v406
          %v450 = vunpack.c.l.b16 %v407
          %v451 = vunpack.c.l.b16 %v408
          %v452 = vunpack.c.l.b16 %v409
          %v453 = vunpack.c.l.b16 %v410
          %v454 = vunpack.c.l.b16 %v411
          %v455 = vunpack.c.l.b16 %v412
          %v456 = vunpack.c.l.b16 %v413
          %v457 = vunpack.c.l.b16 %v414
          %v458 = vunpack.c.l.b16 %v415
          %v459 = vunpack.c.l.b16 %v416
          %v460 = vunpack.c.l.b16 %v417
          %v461 = vunpack.c.l.b16 %v418
          %v462 = vunpack.c.l.b16 %v419
          %v463 = vunpack.c.l.b16 %v420
          %v464 = vpack.c.b16 %v449, %v448
          %v465 = vpack.c.b16 %v451, %v450
          %v466 = vpack.c.b16 %v453, %v452
          %v467 = vpack.c.b16 %v455, %v454
          %v468 = vpack.c.b16 %v457, %v456
          %v469 = vpack.c.b16 %v459, %v458
          %v470 = vpack.c.b16 %v461, %v460
          %v471 = vpack.c.b16 %v463, %v462
          %v476 = vunpack.c.l.b16 %v421
          %v477 = vunpack.c.l.b16 %v422
          %v478 = vunpack.c.l.b16 %v423
          %v479 = vunpack.c.l.b16 %v424
          %v480 = vpack.c.b16 %v477, %v476
          %v481 = vpack.c.b16 %v479, %v478
          %vm484 = vcmask 261120
          %v486 = vsel %vm484, %v464, 0
          %v489 = vsel %vm484, %v465, 0
          %v492 = vsel %vm484, %v466, 0
          %v495 = vsel %vm484, %v467, 0
          %v498 = vsel %vm484, %v468, 0
          %v501 = vsel %vm484, %v469, 0
          %v504 = vsel %vm484, %v470, 0
          %v507 = vsel %vm484, %v471, 0
          %509 = vmatprep.subr.bf16.mxu0 0
          %510 = vmatpush1.bf16.msra.mxu0 0
          %511 = vmatprep.subr.bf16.mxu0 0
          %512 = vmatpush1.bf16.msra.mxu0 0
          %513 = vmatprep.subr.bf16.mxu0 0
          %514 = vmatpush1.bf16.msra.mxu0 0
          %515 = vmatprep.subr.bf16.mxu0 0
          %516 = vmatpush1.bf16.msra.mxu0 0
          %517 = vmatprep.subr.bf16.mxu0 0
          %518 = vmatpush1.bf16.msra.mxu0 0
          %519 = vmatprep.subr.bf16.mxu0 0
          %520 = vmatpush1.bf16.msra.mxu0 0
          %521 = vmatprep.subr.bf16.mxu0 0
          %522 = vmatpush1.bf16.msra.mxu0 %v481
          %523 = vmatprep.subr.bf16.mxu0 0
          %524 = vmatpush1.bf16.msra.mxu0 %v480
          %525 = vmatprep.subr.bf16.mxu0 0
          %526 = vmatpush2.bf16.msra.mxu0 0
          %527 = vmatprep.subr.bf16.mxu0 0
          %528 = vmatpush2.bf16.msra.mxu0 0
          %529 = vmatprep.subr.bf16.mxu0 0
          %530 = vmatpush2.bf16.msra.mxu0 0
          %531 = vmatprep.subr.bf16.mxu0 0
          %532 = vmatpush2.bf16.msra.mxu0 0
          %533 = vmatprep.subr.bf16.mxu0 0
          %534 = vmatpush2.bf16.msra.mxu0 0
          %535 = vmatprep.subr.bf16.mxu0 0
          %536 = vmatpush2.bf16.msra.mxu0 0
          %537 = vmatprep.subr.bf16.mxu0 0
          %538 = vmatpush2.bf16.msra.mxu0 0
          %539 = vmatprep.subr.bf16.mxu0 0
          %540 = vmatpush2.bf16.msra.mxu0 0
          %541 = vmatprep.mubr.bf16.mxu0 0
          %542 = vmatmul.mubr.bf16.gmra.mxu0 %v486
          %v543 = vpop.f32.mrf.mxu0
          %v544 = vadd.f32 %v430, %v543
          %v545 = vpop.f32.mrf.mxu0
          %v546 = vpop.f32.mrf.mxu0
          %v547 = vadd.f32 %v430, %v546
          %v548 = vpop.f32.mrf.mxu0
          %549 = vmatprep.mubr.bf16.mxu0 0
          %550 = vmatmul.mubr.bf16.gmra.mxu0 %v489
          %v551 = vpop.f32.mrf.mxu0
          %v552 = vadd.f32 %v430, %v551
          %v553 = vpop.f32.mrf.mxu0
          %v554 = vpop.f32.mrf.mxu0
          %v555 = vadd.f32 %v430, %v554
          %v556 = vpop.f32.mrf.mxu0
          %557 = vmatprep.mubr.bf16.mxu0 0
          %558 = vmatmul.mubr.bf16.gmra.mxu0 %v492
          %v559 = vpop.f32.mrf.mxu0
          %v560 = vadd.f32 %v430, %v559
          %v561 = vpop.f32.mrf.mxu0
          %v562 = vpop.f32.mrf.mxu0
          %v563 = vadd.f32 %v430, %v562
          %v564 = vpop.f32.mrf.mxu0
          %565 = vmatprep.mubr.bf16.mxu0 0
          %566 = vmatmul.mubr.bf16.gmra.mxu0 %v495
          %v567 = vpop.f32.mrf.mxu0
          %v568 = vadd.f32 %v430, %v567
          %v569 = vpop.f32.mrf.mxu0
          %v570 = vpop.f32.mrf.mxu0
          %v571 = vadd.f32 %v430, %v570
          %v572 = vpop.f32.mrf.mxu0
          %573 = vmatprep.mubr.bf16.mxu0 0
          %574 = vmatmul.mubr.bf16.gmra.mxu0 %v498
          %v575 = vpop.f32.mrf.mxu0
          %v576 = vadd.f32 %v430, %v575
          %v577 = vpop.f32.mrf.mxu0
          %v578 = vpop.f32.mrf.mxu0
          %v579 = vadd.f32 %v430, %v578
          %v580 = vpop.f32.mrf.mxu0
          %581 = vmatprep.mubr.bf16.mxu0 0
          %582 = vmatmul.mubr.bf16.gmra.mxu0 %v501
          %v583 = vpop.f32.mrf.mxu0
          %v584 = vadd.f32 %v430, %v583
          %v585 = vpop.f32.mrf.mxu0
          %v586 = vpop.f32.mrf.mxu0
          %v587 = vadd.f32 %v430, %v586
          %v588 = vpop.f32.mrf.mxu0
          %589 = vmatprep.mubr.bf16.mxu0 0
          %590 = vmatmul.mubr.bf16.gmra.mxu0 %v504
          %v591 = vpop.f32.mrf.mxu0
          %v592 = vadd.f32 %v430, %v591
          %v593 = vpop.f32.mrf.mxu0
          %v594 = vpop.f32.mrf.mxu0
          %v595 = vadd.f32 %v430, %v594
          %v596 = vpop.f32.mrf.mxu0
          %597 = vmatprep.mubr.bf16.mxu0 0
          %598 = vmatmul.mubr.bf16.gmra.mxu0 %v507
          %v599 = vpop.f32.mrf.mxu0
          %v600 = vadd.f32 %v430, %v599
          %v601 = vpop.f32.mrf.mxu0
          %v602 = vpop.f32.mrf.mxu0
          %v603 = vadd.f32 %v430, %v602
          %v604 = vpop.f32.mrf.mxu0
          %605 = vdwg.mxu0
          %v606 = vxor.u32 %v544, 2147483648
          %v607 = vxor.u32 %v547, 2147483648
          %v608 = vxor.u32 %v552, 2147483648
          %v609 = vxor.u32 %v555, 2147483648
          %v610 = vxor.u32 %v560, 2147483648
          %v611 = vxor.u32 %v563, 2147483648
          %v612 = vxor.u32 %v568, 2147483648
          %v613 = vxor.u32 %v571, 2147483648
          %v614 = vxor.u32 %v576, 2147483648
          %v615 = vxor.u32 %v579, 2147483648
          %v616 = vxor.u32 %v584, 2147483648
          %v617 = vxor.u32 %v587, 2147483648
          %v618 = vxor.u32 %v592, 2147483648
          %v619 = vxor.u32 %v595, 2147483648
          %v620 = vxor.u32 %v600, 2147483648
          %v621 = vxor.u32 %v603, 2147483648
          %v622 = vmul.f32 %v606, 1.442695
          %v623 = vpow.pop %v622
          %v624 = vmul.f32 %v607, 1.442695
          %v625 = vpow.pop %v624
          %v626 = vmul.f32 %v608, 1.442695
          %v627 = vpow.pop %v626
          %v628 = vmul.f32 %v609, 1.442695
          %v629 = vpow.pop %v628
          %v630 = vmul.f32 %v610, 1.442695
          %v631 = vpow.pop %v630
          %v632 = vmul.f32 %v611, 1.442695
          %v633 = vpow.pop %v632
          %v634 = vmul.f32 %v612, 1.442695
          %v635 = vpow.pop %v634
          %v636 = vmul.f32 %v613, 1.442695
          %v637 = vpow.pop %v636
          %v638 = vmul.f32 %v614, 1.442695
          %v639 = vpow.pop %v638
          %v640 = vmul.f32 %v615, 1.442695
          %v641 = vpow.pop %v640
          %v642 = vmul.f32 %v616, 1.442695
          %v643 = vpow.pop %v642
          %v644 = vmul.f32 %v617, 1.442695
          %v645 = vpow.pop %v644
          %v646 = vmul.f32 %v618, 1.442695
          %v647 = vpow.pop %v646
          %v648 = vmul.f32 %v619, 1.442695
          %v649 = vpow.pop %v648
          %v650 = vmul.f32 %v620, 1.442695
          %v651 = vpow.pop %v650
          %v652 = vmul.f32 %v621, 1.442695
          %v653 = vpow.pop %v652
          %v654 = vadd.f32 %v623, 1.0
          %v655 = vadd.f32 %v625, 1.0
          %v656 = vadd.f32 %v627, 1.0
          %v657 = vadd.f32 %v629, 1.0
          %v658 = vadd.f32 %v631, 1.0
          %v659 = vadd.f32 %v633, 1.0
          %v660 = vadd.f32 %v635, 1.0
          %v661 = vadd.f32 %v637, 1.0
          %v662 = vadd.f32 %v639, 1.0
          %v663 = vadd.f32 %v641, 1.0
          %v664 = vadd.f32 %v643, 1.0
          %v665 = vadd.f32 %v645, 1.0
          %v666 = vadd.f32 %v647, 1.0
          %v667 = vadd.f32 %v649, 1.0
          %v668 = vadd.f32 %v651, 1.0
          %v669 = vadd.f32 %v653, 1.0
          %v670 = vrcp.pop %v654
          %v671 = vmul.f32 1.0, %v670
          %v672 = vrcp.pop %v655
          %v673 = vmul.f32 1.0, %v672
          %v674 = vrcp.pop %v656
          %v675 = vmul.f32 1.0, %v674
          %v676 = vrcp.pop %v657
          %v677 = vmul.f32 1.0, %v676
          %v678 = vrcp.pop %v658
          %v679 = vmul.f32 1.0, %v678
          %v680 = vrcp.pop %v659
          %v681 = vmul.f32 1.0, %v680
          %v682 = vrcp.pop %v660
          %v683 = vmul.f32 1.0, %v682
          %v684 = vrcp.pop %v661
          %v685 = vmul.f32 1.0, %v684
          %v686 = vrcp.pop %v662
          %v687 = vmul.f32 1.0, %v686
          %v688 = vrcp.pop %v663
          %v689 = vmul.f32 1.0, %v688
          %v690 = vrcp.pop %v664
          %v691 = vmul.f32 1.0, %v690
          %v692 = vrcp.pop %v665
          %v693 = vmul.f32 1.0, %v692
          %v694 = vrcp.pop %v666
          %v695 = vmul.f32 1.0, %v694
          %v696 = vrcp.pop %v667
          %v697 = vmul.f32 1.0, %v696
          %v698 = vrcp.pop %v668
          %v699 = vmul.f32 1.0, %v698
          %v700 = vrcp.pop %v669
          %v701 = vmul.f32 1.0, %v700
          %v702 = vmul.f32 %v544, %v671
          %v703 = vmul.f32 %v547, %v673
          %v704 = vmul.f32 %v552, %v675
          %v705 = vmul.f32 %v555, %v677
          %v706 = vmul.f32 %v560, %v679
          %v707 = vmul.f32 %v563, %v681
          %v708 = vmul.f32 %v568, %v683
          %v709 = vmul.f32 %v571, %v685
          %v710 = vmul.f32 %v576, %v687
          %v711 = vmul.f32 %v579, %v689
          %v712 = vmul.f32 %v584, %v691
          %v713 = vmul.f32 %v587, %v693
          %v714 = vmul.f32 %v592, %v695
          %v715 = vmul.f32 %v595, %v697
          %v716 = vmul.f32 %v600, %v699
          %v717 = vmul.f32 %v603, %v701
          %v718 = vpack.c.bf16 %v703, %v702
          %v719 = vpack.c.bf16 %v705, %v704
          %v720 = vpack.c.bf16 %v707, %v706
          %v721 = vpack.c.bf16 %v709, %v708
          %v722 = vpack.c.bf16 %v711, %v710
          %v723 = vpack.c.bf16 %v713, %v712
          %v724 = vpack.c.bf16 %v715, %v714
          %v725 = vpack.c.bf16 %v717, %v716
          %v734 = vunpack.c.l.b16 %v718
          %v735 = vunpack.c.h.b16 %v718
          %v736 = vunpack.c.l.b16 %v719
          %v737 = vunpack.c.h.b16 %v719
          %v738 = vunpack.c.l.b16 %v720
          %v739 = vunpack.c.h.b16 %v720
          %v740 = vunpack.c.l.b16 %v721
          %v741 = vunpack.c.h.b16 %v721
          %v742 = vunpack.c.l.b16 %v722
          %v743 = vunpack.c.h.b16 %v722
          %v744 = vunpack.c.l.b16 %v723
          %v745 = vunpack.c.h.b16 %v723
          %v746 = vunpack.c.l.b16 %v724
          %v747 = vunpack.c.h.b16 %v724
          %v748 = vunpack.c.l.b16 %v725
          %v749 = vunpack.c.h.b16 %v725
          %v750 = vpack.c.b16 %v734, %v734
          %v751 = vpack.c.b16 %v735, %v735
          %v752 = vpack.c.b16 %v736, %v736
          %v753 = vpack.c.b16 %v737, %v737
          %v754 = vpack.c.b16 %v738, %v738
          %v755 = vpack.c.b16 %v739, %v739
          %v756 = vpack.c.b16 %v740, %v740
          %v757 = vpack.c.b16 %v741, %v741
          %v758 = vpack.c.b16 %v742, %v742
          %v759 = vpack.c.b16 %v743, %v743
          %v760 = vpack.c.b16 %v744, %v744
          %v761 = vpack.c.b16 %v745, %v745
          %v762 = vpack.c.b16 %v746, %v746
          %v763 = vpack.c.b16 %v747, %v747
          %v764 = vpack.c.b16 %v748, %v748
          %v765 = vpack.c.b16 %v749, %v749
          %782 = vst [vmem:[#allocation2] sm:$0xf] %v750
          %783 = vst [vmem:[#allocation2 + $0x4] sm:$0xf] %v751
          %784 = vst [vmem:[#allocation2 + $0x8] sm:$0xf] %v752
          %785 = vst [vmem:[#allocation2 + $0xc] sm:$0xf] %v753
          %786 = vst [vmem:[#allocation2 + $0x10] sm:$0xf] %v754
          %787 = vst [vmem:[#allocation2 + $0x14] sm:$0xf] %v755
          %788 = vst [vmem:[#allocation2 + $0x18] sm:$0xf] %v756
          %789 = vst [vmem:[#allocation2 + $0x1c] sm:$0xf] %v757
          %790 = vst [vmem:[#allocation2 + $0x20] sm:$0xf] %v758
          %791 = vst [vmem:[#allocation2 + $0x24] sm:$0xf] %v759
          %792 = vst [vmem:[#allocation2 + $0x28] sm:$0xf] %v760
          %793 = vst [vmem:[#allocation2 + $0x2c] sm:$0xf] %v761
          %794 = vst [vmem:[#allocation2 + $0x30] sm:$0xf] %v762
          %795 = vst [vmem:[#allocation2 + $0x34] sm:$0xf] %v763
          %796 = vst [vmem:[#allocation2 + $0x38] sm:$0xf] %v764
          %797 = vst [vmem:[#allocation2 + $0x3c] sm:$0xf] %v765
          %798 = vst [vmem:[#allocation3] sm:$0xff] 0.0
        $region68: #{efficientnet_b3_arcface_forward.1} parent=55 // pred_fallthru
          _
        %v799 = vld [vmem:[#allocation2] sm:$0xf]
        %v800 = vld [vmem:[#allocation2 + $0x4] sm:$0xf]
        %v801 = vld [vmem:[#allocation2 + $0x8] sm:$0xf]
        %v802 = vld [vmem:[#allocation2 + $0xc] sm:$0xf]
        %v803 = vld [vmem:[#allocation2 + $0x10] sm:$0xf]
        %v804 = vld [vmem:[#allocation2 + $0x14] sm:$0xf]
        %v805 = vld [vmem:[#allocation2 + $0x18] sm:$0xf]
        %v806 = vld [vmem:[#allocation2 + $0x1c] sm:$0xf]
        %v807 = vld [vmem:[#allocation2 + $0x20] sm:$0xf]
        %v808 = vld [vmem:[#allocation2 + $0x24] sm:$0xf]
        %v809 = vld [vmem:[#allocation2 + $0x28] sm:$0xf]
        %v810 = vld [vmem:[#allocation2 + $0x2c] sm:$0xf]
        %v811 = vld [vmem:[#allocation2 + $0x30] sm:$0xf]
        %v812 = vld [vmem:[#allocation2 + $0x34] sm:$0xf]
        %v813 = vld [vmem:[#allocation2 + $0x38] sm:$0xf]
        %v814 = vld [vmem:[#allocation2 + $0x3c] sm:$0xf]
        %v815 = vld [vmem:[%s342] sm:$0xff]
        %v816 = vld [vmem:[%s342 + $0x8] sm:$0xff]
        %v817 = vld [vmem:[%s342 + $0x10] sm:$0xff]
        %v818 = vld [vmem:[%s342 + $0x18] sm:$0xff]
        %v819 = vld [vmem:[%s342 + $0x20] sm:$0xff]
        %v820 = vld [vmem:[%s342 + $0x28] sm:$0xff]
        %v821 = vld [vmem:[%s342 + $0x30] sm:$0xff]
        %v822 = vld [vmem:[%s342 + $0x38] sm:$0xff]
        %v823 = vld [vmem:[%s342 + $0x40] sm:$0xff]
        %v824 = vld [vmem:[%s342 + $0x48] sm:$0xff]
        %v825 = vld [vmem:[%s342 + $0x50] sm:$0xff]
        %v826 = vld [vmem:[%s342 + $0x58] sm:$0xff]
        %v827 = vld [vmem:[%s342 + $0x60] sm:$0xff]
        %v828 = vld [vmem:[%s342 + $0x68] sm:$0xff]
        %v829 = vld [vmem:[%s342 + $0x70] sm:$0xff]
        %v830 = vld [vmem:[%s342 + $0x78] sm:$0xff]
        %v831 = vld [vmem:[%s342 + $0x80] sm:$0xff]
        %v832 = vld [vmem:[%s342 + $0x88] sm:$0xff]
        %v833 = vld [vmem:[%s342 + $0x90] sm:$0xff]
        %v834 = vld [vmem:[%s342 + $0x98] sm:$0xff]
        %v835 = vld [vmem:[%s342 + $0xa0] sm:$0xff]
        %v836 = vld [vmem:[%s342 + $0xa8] sm:$0xff]
        %v837 = vld [vmem:[%s342 + $0xb0] sm:$0xff]
        %v838 = vld [vmem:[%s342 + $0xb8] sm:$0xff]
        %v839 = vld [vmem:[%s342 + $0xc0] sm:$0xff]
        %v840 = vld [vmem:[%s342 + $0xc8] sm:$0xff]
        %v841 = vld [vmem:[%s342 + $0xd0] sm:$0xff]
        %v842 = vld [vmem:[%s342 + $0xd8] sm:$0xff]
        %v843 = vld [vmem:[%s342 + $0xe0] sm:$0xff]
        %v844 = vld [vmem:[%s342 + $0xe8] sm:$0xff]
        %v845 = vld [vmem:[%s342 + $0xf0] sm:$0xff]
        %v846 = vld [vmem:[%s342 + $0xf8] sm:$0xff]
        %v847 = vld [vmem:[%s390] sm:$0xf]
        %v849 = vlaneseq
        %v850 = vshrl.u32 %v849, 7
        %v851 = vsub.s32 0, %v850
        %v852 = vrot.slane %v847, %v851
        %v853 = vlaneseq
        %v854 = vshrl.u32 %v853, 7
        %v855 = vsub.s32 1, %v854
        %v856 = vrot.slane %v847, %v855
        %v857 = vlaneseq
        %v858 = vshrl.u32 %v857, 7
        %v859 = vsub.s32 2, %v858
        %v860 = vrot.slane %v847, %v859
        %v861 = vlaneseq
        %v862 = vshrl.u32 %v861, 7
        %v863 = vsub.s32 3, %v862
        %v864 = vrot.slane %v847, %v863
        %v885 = vunpack.c.l.b16 %v799
        %v886 = vunpack.c.l.b16 %v800
        %v887 = vunpack.c.l.b16 %v801
        %v888 = vunpack.c.l.b16 %v802
        %v889 = vunpack.c.l.b16 %v803
        %v890 = vunpack.c.l.b16 %v804
        %v891 = vunpack.c.l.b16 %v805
        %v892 = vunpack.c.l.b16 %v806
        %v893 = vunpack.c.l.b16 %v807
        %v894 = vunpack.c.l.b16 %v808
        %v895 = vunpack.c.l.b16 %v809
        %v896 = vunpack.c.l.b16 %v810
        %v897 = vunpack.c.l.b16 %v811
        %v898 = vunpack.c.l.b16 %v812
        %v899 = vunpack.c.l.b16 %v813
        %v900 = vunpack.c.l.b16 %v814
        %v901 = vpack.c.b16 %v886, %v885
        %v902 = vpack.c.b16 %v888, %v887
        %v903 = vpack.c.b16 %v890, %v889
        %v904 = vpack.c.b16 %v892, %v891
        %v905 = vpack.c.b16 %v894, %v893
        %v906 = vpack.c.b16 %v896, %v895
        %v907 = vpack.c.b16 %v898, %v897
        %v908 = vpack.c.b16 %v900, %v899
        %v949 = vunpack.c.l.b16 %v815
        %v950 = vunpack.c.h.b16 %v815
        %v951 = vunpack.c.l.b16 %v816
        %v952 = vunpack.c.h.b16 %v816
        %v953 = vunpack.c.l.b16 %v817
        %v954 = vunpack.c.h.b16 %v817
        %v955 = vunpack.c.l.b16 %v818
        %v956 = vunpack.c.h.b16 %v818
        %v957 = vunpack.c.l.b16 %v819
        %v958 = vunpack.c.h.b16 %v819
        %v959 = vunpack.c.l.b16 %v820
        %v960 = vunpack.c.h.b16 %v820
        %v961 = vunpack.c.l.b16 %v821
        %v962 = vunpack.c.h.b16 %v821
        %v963 = vunpack.c.l.b16 %v822
        %v964 = vunpack.c.h.b16 %v822
        %v965 = vunpack.c.l.b16 %v823
        %v966 = vunpack.c.h.b16 %v823
        %v967 = vunpack.c.l.b16 %v824
        %v968 = vunpack.c.h.b16 %v824
        %v969 = vunpack.c.l.b16 %v825
        %v970 = vunpack.c.h.b16 %v825
        %v971 = vunpack.c.l.b16 %v826
        %v972 = vunpack.c.h.b16 %v826
        %v973 = vunpack.c.l.b16 %v827
        %v974 = vunpack.c.h.b16 %v827
        %v975 = vunpack.c.l.b16 %v828
        %v976 = vunpack.c.h.b16 %v828
        %v977 = vunpack.c.l.b16 %v829
        %v978 = vunpack.c.h.b16 %v829
        %v979 = vunpack.c.l.b16 %v830
        %v980 = vunpack.c.h.b16 %v830
        %v981 = vunpack.c.l.b16 %v831
        %v982 = vunpack.c.h.b16 %v831
        %v983 = vunpack.c.l.b16 %v832
        %v984 = vunpack.c.h.b16 %v832
        %v985 = vunpack.c.l.b16 %v833
        %v986 = vunpack.c.h.b16 %v833
        %v987 = vunpack.c.l.b16 %v834
        %v988 = vunpack.c.h.b16 %v834
        %v989 = vunpack.c.l.b16 %v835
        %v990 = vunpack.c.h.b16 %v835
        %v991 = vunpack.c.l.b16 %v836
        %v992 = vunpack.c.h.b16 %v836
        %v993 = vunpack.c.l.b16 %v837
        %v994 = vunpack.c.h.b16 %v837
        %v995 = vunpack.c.l.b16 %v838
        %v996 = vunpack.c.h.b16 %v838
        %v997 = vunpack.c.l.b16 %v839
        %v998 = vunpack.c.h.b16 %v839
        %v999 = vunpack.c.l.b16 %v840
        %v1000 = vunpack.c.h.b16 %v840
        %v1001 = vunpack.c.l.b16 %v841
        %v1002 = vunpack.c.h.b16 %v841
        %v1003 = vunpack.c.l.b16 %v842
        %v1004 = vunpack.c.h.b16 %v842
        %v1005 = vunpack.c.l.b16 %v843
        %v1006 = vunpack.c.h.b16 %v843
        %v1007 = vunpack.c.l.b16 %v844
        %v1008 = vunpack.c.h.b16 %v844
        %v1009 = vunpack.c.l.b16 %v845
        %v1010 = vunpack.c.h.b16 %v845
        %v1011 = vunpack.c.l.b16 %v846
        %v1012 = vunpack.c.h.b16 %v846
        %v1013 = vpack.c.b16 %v953, %v949
        %v1014 = vpack.c.b16 %v954, %v950
        %v1015 = vpack.c.b16 %v955, %v951
        %v1016 = vpack.c.b16 %v956, %v952
        %v1017 = vpack.c.b16 %v961, %v957
        %v1018 = vpack.c.b16 %v962, %v958
        %v1019 = vpack.c.b16 %v963, %v959
        %v1020 = vpack.c.b16 %v964, %v960
        %v1021 = vpack.c.b16 %v969, %v965
        %v1022 = vpack.c.b16 %v970, %v966
        %v1023 = vpack.c.b16 %v971, %v967
        %v1024 = vpack.c.b16 %v972, %v968
        %v1025 = vpack.c.b16 %v977, %v973
        %v1026 = vpack.c.b16 %v978, %v974
        %v1027 = vpack.c.b16 %v979, %v975
        %v1028 = vpack.c.b16 %v980, %v976
        %v1029 = vpack.c.b16 %v985, %v981
        %v1030 = vpack.c.b16 %v986, %v982
        %v1031 = vpack.c.b16 %v987, %v983
        %v1032 = vpack.c.b16 %v988, %v984
        %v1033 = vpack.c.b16 %v993, %v989
        %v1034 = vpack.c.b16 %v994, %v990
        %v1035 = vpack.c.b16 %v995, %v991
        %v1036 = vpack.c.b16 %v996, %v992
        %v1037 = vpack.c.b16 %v1001, %v997
        %v1038 = vpack.c.b16 %v1002, %v998
        %v1039 = vpack.c.b16 %v1003, %v999
        %v1040 = vpack.c.b16 %v1004, %v1000
        %v1041 = vpack.c.b16 %v1009, %v1005
        %v1042 = vpack.c.b16 %v1010, %v1006
        %v1043 = vpack.c.b16 %v1011, %v1007
        %v1044 = vpack.c.b16 %v1012, %v1008
        %1077 = vmatprep.subr.bf16.mxu0 %v1042
        %1078 = vmatpush1.bf16.msra.mxu0 %v1041
        %1079 = vmatprep.subr.bf16.mxu0 %v1038
        %1080 = vmatpush1.bf16.msra.mxu0 %v1037
        %1081 = vmatprep.subr.bf16.mxu0 %v1034
        %1082 = vmatpush1.bf16.msra.mxu0 %v1033
        %1083 = vmatprep.subr.bf16.mxu0 %v1030
        %1084 = vmatpush1.bf16.msra.mxu0 %v1029
        %1085 = vmatprep.subr.bf16.mxu0 %v1026
        %1086 = vmatpush1.bf16.msra.mxu0 %v1025
        %1087 = vmatprep.subr.bf16.mxu0 %v1022
        %1088 = vmatpush1.bf16.msra.mxu0 %v1021
        %1089 = vmatprep.subr.bf16.mxu0 %v1018
        %1090 = vmatpush1.bf16.msra.mxu0 %v1017
        %1091 = vmatprep.subr.bf16.mxu0 %v1014
        %1092 = vmatpush1.bf16.msra.mxu0 %v1013
        %1093 = vmatprep.subr.bf16.mxu0 0
        %1094 = vmatpush2.bf16.msra.mxu0 0
        %1095 = vmatprep.subr.bf16.mxu0 0
        %1096 = vmatpush2.bf16.msra.mxu0 0
        %1097 = vmatprep.subr.bf16.mxu0 0
        %1098 = vmatpush2.bf16.msra.mxu0 0
        %1099 = vmatprep.subr.bf16.mxu0 0
        %1100 = vmatpush2.bf16.msra.mxu0 0
        %1101 = vmatprep.subr.bf16.mxu0 0
        %1102 = vmatpush2.bf16.msra.mxu0 0
        %1103 = vmatprep.subr.bf16.mxu0 0
        %1104 = vmatpush2.bf16.msra.mxu0 0
        %1105 = vmatprep.subr.bf16.mxu0 0
        %1106 = vmatpush2.bf16.msra.mxu0 0
        %1107 = vmatprep.subr.bf16.mxu0 0
        %1108 = vmatpush2.bf16.msra.mxu0 0
        %1109 = vmatprep.mubr.bf16.mxu0 0
        %1110 = vmatmul.mubr.bf16.gmra.mxu0 %v901
        %v1111 = vpop.f32.mrf.mxu0
        %v1112 = vadd.f32 %v852, %v1111
        %v1113 = vpop.f32.mrf.mxu0
        %v1114 = vadd.f32 %v856, %v1113
        %v1115 = vpop.f32.mrf.mxu0
        %v1116 = vadd.f32 %v852, %v1115
        %v1117 = vpop.f32.mrf.mxu0
        %v1118 = vadd.f32 %v856, %v1117
        %1119 = vmatprep.mubr.bf16.mxu0 0
        %1120 = vmatmul.mubr.bf16.gmra.mxu0 %v902
        %v1121 = vpop.f32.mrf.mxu0
        %v1122 = vadd.f32 %v852, %v1121
        %v1123 = vpop.f32.mrf.mxu0
        %v1124 = vadd.f32 %v856, %v1123
        %v1125 = vpop.f32.mrf.mxu0
        %v1126 = vadd.f32 %v852, %v1125
        %v1127 = vpop.f32.mrf.mxu0
        %v1128 = vadd.f32 %v856, %v1127
        %1129 = vmatprep.mubr.bf16.mxu0 0
        %1130 = vmatmul.mubr.bf16.gmra.mxu0 %v903
        %v1131 = vpop.f32.mrf.mxu0
        %v1132 = vadd.f32 %v852, %v1131
        %v1133 = vpop.f32.mrf.mxu0
        %v1134 = vadd.f32 %v856, %v1133
        %v1135 = vpop.f32.mrf.mxu0
        %v1136 = vadd.f32 %v852, %v1135
        %v1137 = vpop.f32.mrf.mxu0
        %v1138 = vadd.f32 %v856, %v1137
        %1139 = vmatprep.mubr.bf16.mxu0 0
        %1140 = vmatmul.mubr.bf16.gmra.mxu0 %v904
        %v1141 = vpop.f32.mrf.mxu0
        %v1142 = vadd.f32 %v852, %v1141
        %v1143 = vpop.f32.mrf.mxu0
        %v1144 = vadd.f32 %v856, %v1143
        %v1145 = vpop.f32.mrf.mxu0
        %v1146 = vadd.f32 %v852, %v1145
        %v1147 = vpop.f32.mrf.mxu0
        %v1148 = vadd.f32 %v856, %v1147
        %1149 = vmatprep.mubr.bf16.mxu0 0
        %1150 = vmatmul.mubr.bf16.gmra.mxu0 %v905
        %v1151 = vpop.f32.mrf.mxu0
        %v1152 = vadd.f32 %v852, %v1151
        %v1153 = vpop.f32.mrf.mxu0
        %v1154 = vadd.f32 %v856, %v1153
        %v1155 = vpop.f32.mrf.mxu0
        %v1156 = vadd.f32 %v852, %v1155
        %v1157 = vpop.f32.mrf.mxu0
        %v1158 = vadd.f32 %v856, %v1157
        %1159 = vmatprep.mubr.bf16.mxu0 0
        %1160 = vmatmul.mubr.bf16.gmra.mxu0 %v906
        %v1161 = vpop.f32.mrf.mxu0
        %v1162 = vadd.f32 %v852, %v1161
        %v1163 = vpop.f32.mrf.mxu0
        %v1164 = vadd.f32 %v856, %v1163
        %v1165 = vpop.f32.mrf.mxu0
        %v1166 = vadd.f32 %v852, %v1165
        %v1167 = vpop.f32.mrf.mxu0
        %v1168 = vadd.f32 %v856, %v1167
        %1169 = vmatprep.mubr.bf16.mxu0 0
        %1170 = vmatmul.mubr.bf16.gmra.mxu0 %v907
        %v1171 = vpop.f32.mrf.mxu0
        %v1172 = vadd.f32 %v852, %v1171
        %v1173 = vpop.f32.mrf.mxu0
        %v1174 = vadd.f32 %v856, %v1173
        %v1175 = vpop.f32.mrf.mxu0
        %v1176 = vadd.f32 %v852, %v1175
        %v1177 = vpop.f32.mrf.mxu0
        %v1178 = vadd.f32 %v856, %v1177
        %1179 = vmatprep.mubr.bf16.mxu0 0
        %1180 = vmatmul.mubr.bf16.gmra.mxu0 %v908
        %v1181 = vpop.f32.mrf.mxu0
        %v1182 = vadd.f32 %v852, %v1181
        %v1183 = vpop.f32.mrf.mxu0
        %v1184 = vadd.f32 %v856, %v1183
        %v1185 = vpop.f32.mrf.mxu0
        %v1186 = vadd.f32 %v852, %v1185
        %v1187 = vpop.f32.mrf.mxu0
        %v1188 = vadd.f32 %v856, %v1187
        %1189 = vdwg.mxu0
        %1190 = vmatprep.subr.bf16.mxu0 %v1044
        %1191 = vmatpush1.bf16.msra.mxu0 %v1043
        %1192 = vmatprep.subr.bf16.mxu0 %v1040
        %1193 = vmatpush1.bf16.msra.mxu0 %v1039
        %1194 = vmatprep.subr.bf16.mxu0 %v1036
        %1195 = vmatpush1.bf16.msra.mxu0 %v1035
        %1196 = vmatprep.subr.bf16.mxu0 %v1032
        %1197 = vmatpush1.bf16.msra.mxu0 %v1031
        %1198 = vmatprep.subr.bf16.mxu0 %v1028
        %1199 = vmatpush1.bf16.msra.mxu0 %v1027
        %1200 = vmatprep.subr.bf16.mxu0 %v1024
        %1201 = vmatpush1.bf16.msra.mxu0 %v1023
        %1202 = vmatprep.subr.bf16.mxu0 %v1020
        %1203 = vmatpush1.bf16.msra.mxu0 %v1019
        %1204 = vmatprep.subr.bf16.mxu0 %v1016
        %1205 = vmatpush1.bf16.msra.mxu0 %v1015
        %1206 = vmatprep.subr.bf16.mxu0 0
        %1207 = vmatpush2.bf16.msra.mxu0 0
        %1208 = vmatprep.subr.bf16.mxu0 0
        %1209 = vmatpush2.bf16.msra.mxu0 0
        %1210 = vmatprep.subr.bf16.mxu0 0
        %1211 = vmatpush2.bf16.msra.mxu0 0
        %1212 = vmatprep.subr.bf16.mxu0 0
        %1213 = vmatpush2.bf16.msra.mxu0 0
        %1214 = vmatprep.subr.bf16.mxu0 0
        %1215 = vmatpush2.bf16.msra.mxu0 0
        %1216 = vmatprep.subr.bf16.mxu0 0
        %1217 = vmatpush2.bf16.msra.mxu0 0
        %1218 = vmatprep.subr.bf16.mxu0 0
        %1219 = vmatpush2.bf16.msra.mxu0 0
        %1220 = vmatprep.subr.bf16.mxu0 0
        %1221 = vmatpush2.bf16.msra.mxu0 0
        %1222 = vmatprep.mubr.bf16.mxu0 0
        %1223 = vmatmul.mubr.bf16.gmra.mxu0 %v901
        %v1224 = vpop.f32.mrf.mxu0
        %v1225 = vadd.f32 %v860, %v1224
        %v1226 = vpop.f32.mrf.mxu0
        %v1227 = vadd.f32 %v864, %v1226
        %v1228 = vpop.f32.mrf.mxu0
        %v1229 = vadd.f32 %v860, %v1228
        %v1230 = vpop.f32.mrf.mxu0
        %v1231 = vadd.f32 %v864, %v1230
        %1232 = vmatprep.mubr.bf16.mxu0 0
        %1233 = vmatmul.mubr.bf16.gmra.mxu0 %v902
        %v1234 = vpop.f32.mrf.mxu0
        %v1235 = vadd.f32 %v860, %v1234
        %v1236 = vpop.f32.mrf.mxu0
        %v1237 = vadd.f32 %v864, %v1236
        %v1238 = vpop.f32.mrf.mxu0
        %v1239 = vadd.f32 %v860, %v1238
        %v1240 = vpop.f32.mrf.mxu0
        %v1241 = vadd.f32 %v864, %v1240
        %1242 = vmatprep.mubr.bf16.mxu0 0
        %1243 = vmatmul.mubr.bf16.gmra.mxu0 %v903
        %v1244 = vpop.f32.mrf.mxu0
        %v1245 = vadd.f32 %v860, %v1244
        %v1246 = vpop.f32.mrf.mxu0
        %v1247 = vadd.f32 %v864, %v1246
        %v1248 = vpop.f32.mrf.mxu0
        %v1249 = vadd.f32 %v860, %v1248
        %v1250 = vpop.f32.mrf.mxu0
        %v1251 = vadd.f32 %v864, %v1250
        %1252 = vmatprep.mubr.bf16.mxu0 0
        %1253 = vmatmul.mubr.bf16.gmra.mxu0 %v904
        %v1254 = vpop.f32.mrf.mxu0
        %v1255 = vadd.f32 %v860, %v1254
        %v1256 = vpop.f32.mrf.mxu0
        %v1257 = vadd.f32 %v864, %v1256
        %v1258 = vpop.f32.mrf.mxu0
        %v1259 = vadd.f32 %v860, %v1258
        %v1260 = vpop.f32.mrf.mxu0
        %v1261 = vadd.f32 %v864, %v1260
        %1262 = vmatprep.mubr.bf16.mxu0 0
        %1263 = vmatmul.mubr.bf16.gmra.mxu0 %v905
        %v1264 = vpop.f32.mrf.mxu0
        %v1265 = vadd.f32 %v860, %v1264
        %v1266 = vpop.f32.mrf.mxu0
        %v1267 = vadd.f32 %v864, %v1266
        %v1268 = vpop.f32.mrf.mxu0
        %v1269 = vadd.f32 %v860, %v1268
        %v1270 = vpop.f32.mrf.mxu0
        %v1271 = vadd.f32 %v864, %v1270
        %1272 = vmatprep.mubr.bf16.mxu0 0
        %1273 = vmatmul.mubr.bf16.gmra.mxu0 %v906
        %v1274 = vpop.f32.mrf.mxu0
        %v1275 = vadd.f32 %v860, %v1274
        %v1276 = vpop.f32.mrf.mxu0
        %v1277 = vadd.f32 %v864, %v1276
        %v1278 = vpop.f32.mrf.mxu0
        %v1279 = vadd.f32 %v860, %v1278
        %v1280 = vpop.f32.mrf.mxu0
        %v1281 = vadd.f32 %v864, %v1280
        %1282 = vmatprep.mubr.bf16.mxu0 0
        %1283 = vmatmul.mubr.bf16.gmra.mxu0 %v907
        %v1284 = vpop.f32.mrf.mxu0
        %v1285 = vadd.f32 %v860, %v1284
        %v1286 = vpop.f32.mrf.mxu0
        %v1287 = vadd.f32 %v864, %v1286
        %v1288 = vpop.f32.mrf.mxu0
        %v1289 = vadd.f32 %v860, %v1288
        %v1290 = vpop.f32.mrf.mxu0
        %v1291 = vadd.f32 %v864, %v1290
        %1292 = vmatprep.mubr.bf16.mxu0 0
        %1293 = vmatmul.mubr.bf16.gmra.mxu0 %v908
        %v1294 = vpop.f32.mrf.mxu0
        %v1295 = vadd.f32 %v860, %v1294
        %v1296 = vpop.f32.mrf.mxu0
        %v1297 = vadd.f32 %v864, %v1296
        %v1298 = vpop.f32.mrf.mxu0
        %v1299 = vadd.f32 %v860, %v1298
        %v1300 = vpop.f32.mrf.mxu0
        %v1301 = vadd.f32 %v864, %v1300
        %1302 = vdwg.mxu0
        %v1303 = vpack.c.bf16 %v1116, %v1112
        %v1304 = vpack.c.bf16 %v1118, %v1114
        %v1305 = vpack.c.bf16 %v1229, %v1225
        %v1306 = vpack.c.bf16 %v1231, %v1227
        %v1307 = vpack.c.bf16 %v1126, %v1122
        %v1308 = vpack.c.bf16 %v1128, %v1124
        %v1309 = vpack.c.bf16 %v1239, %v1235
        %v1310 = vpack.c.bf16 %v1241, %v1237
        %v1311 = vpack.c.bf16 %v1136, %v1132
        %v1312 = vpack.c.bf16 %v1138, %v1134
        %v1313 = vpack.c.bf16 %v1249, %v1245
        %v1314 = vpack.c.bf16 %v1251, %v1247
        %v1315 = vpack.c.bf16 %v1146, %v1142
        %v1316 = vpack.c.bf16 %v1148, %v1144
        %v1317 = vpack.c.bf16 %v1259, %v1255
        %v1318 = vpack.c.bf16 %v1261, %v1257
        %v1319 = vpack.c.bf16 %v1156, %v1152
        %v1320 = vpack.c.bf16 %v1158, %v1154
        %v1321 = vpack.c.bf16 %v1269, %v1265
        %v1322 = vpack.c.bf16 %v1271, %v1267
        %v1323 = vpack.c.bf16 %v1166, %v1162
        %v1324 = vpack.c.bf16 %v1168, %v1164
        %v1325 = vpack.c.bf16 %v1279, %v1275
        %v1326 = vpack.c.bf16 %v1281, %v1277
        %v1327 = vpack.c.bf16 %v1176, %v1172
        %v1328 = vpack.c.bf16 %v1178, %v1174
        %v1329 = vpack.c.bf16 %v1289, %v1285
        %v1330 = vpack.c.bf16 %v1291, %v1287
        %v1331 = vpack.c.bf16 %v1186, %v1182
        %v1332 = vpack.c.bf16 %v1188, %v1184
        %v1333 = vpack.c.bf16 %v1299, %v1295
        %v1334 = vpack.c.bf16 %v1301, %v1297
        %v1335 = vxor.u32 %v1303, 2147516416
        %v1336 = vxor.u32 %v1304, 2147516416
        %v1337 = vxor.u32 %v1305, 2147516416
        %v1338 = vxor.u32 %v1306, 2147516416
        %v1339 = vxor.u32 %v1307, 2147516416
        %v1340 = vxor.u32 %v1308, 2147516416
        %v1341 = vxor.u32 %v1309, 2147516416
        %v1342 = vxor.u32 %v1310, 2147516416
        %v1343 = vxor.u32 %v1311, 2147516416
        %v1344 = vxor.u32 %v1312, 2147516416
        %v1345 = vxor.u32 %v1313, 2147516416
        %v1346 = vxor.u32 %v1314, 2147516416
        %v1347 = vxor.u32 %v1315, 2147516416
        %v1348 = vxor.u32 %v1316, 2147516416
        %v1349 = vxor.u32 %v1317, 2147516416
        %v1350 = vxor.u32 %v1318, 2147516416
        %v1351 = vxor.u32 %v1319, 2147516416
        %v1352 = vxor.u32 %v1320, 2147516416
        %v1353 = vxor.u32 %v1321, 2147516416
        %v1354 = vxor.u32 %v1322, 2147516416
        %v1355 = vxor.u32 %v1323, 2147516416
        %v1356 = vxor.u32 %v1324, 2147516416
        %v1357 = vxor.u32 %v1325, 2147516416
        %v1358 = vxor.u32 %v1326, 2147516416
        %v1359 = vxor.u32 %v1327, 2147516416
        %v1360 = vxor.u32 %v1328, 2147516416
        %v1361 = vxor.u32 %v1329, 2147516416
        %v1362 = vxor.u32 %v1330, 2147516416
        %v1363 = vxor.u32 %v1331, 2147516416
        %v1364 = vxor.u32 %v1332, 2147516416
        %v1365 = vxor.u32 %v1333, 2147516416
        %v1366 = vxor.u32 %v1334, 2147516416
        %v1368 = vmul.bf16 %v1335, 1069105081
        %v1369 = vpow.bf16.pop %v1368
        %v1371 = vmul.bf16 %v1336, 1069105081
        %v1372 = vpow.bf16.pop %v1371
        %v1374 = vmul.bf16 %v1337, 1069105081
        %v1375 = vpow.bf16.pop %v1374
        %v1377 = vmul.bf16 %v1338, 1069105081
        %v1378 = vpow.bf16.pop %v1377
        %v1380 = vmul.bf16 %v1339, 1069105081
        %v1381 = vpow.bf16.pop %v1380
        %v1383 = vmul.bf16 %v1340, 1069105081
        %v1384 = vpow.bf16.pop %v1383
        %v1386 = vmul.bf16 %v1341, 1069105081
        %v1387 = vpow.bf16.pop %v1386
        %v1389 = vmul.bf16 %v1342, 1069105081
        %v1390 = vpow.bf16.pop %v1389
        %v1392 = vmul.bf16 %v1343, 1069105081
        %v1393 = vpow.bf16.pop %v1392
        %v1395 = vmul.bf16 %v1344, 1069105081
        %v1396 = vpow.bf16.pop %v1395
        %v1398 = vmul.bf16 %v1345, 1069105081
        %v1399 = vpow.bf16.pop %v1398
        %v1401 = vmul.bf16 %v1346, 1069105081
        %v1402 = vpow.bf16.pop %v1401
        %v1404 = vmul.bf16 %v1347, 1069105081
        %v1405 = vpow.bf16.pop %v1404
        %v1407 = vmul.bf16 %v1348, 1069105081
        %v1408 = vpow.bf16.pop %v1407
        %v1410 = vmul.bf16 %v1349, 1069105081
        %v1411 = vpow.bf16.pop %v1410
        %v1413 = vmul.bf16 %v1350, 1069105081
        %v1414 = vpow.bf16.pop %v1413
        %v1416 = vmul.bf16 %v1351, 1069105081
        %v1417 = vpow.bf16.pop %v1416
        %v1419 = vmul.bf16 %v1352, 1069105081
        %v1420 = vpow.bf16.pop %v1419
        %v1422 = vmul.bf16 %v1353, 1069105081
        %v1423 = vpow.bf16.pop %v1422
        %v1425 = vmul.bf16 %v1354, 1069105081
        %v1426 = vpow.bf16.pop %v1425
        %v1428 = vmul.bf16 %v1355, 1069105081
        %v1429 = vpow.bf16.pop %v1428
        %v1431 = vmul.bf16 %v1356, 1069105081
        %v1432 = vpow.bf16.pop %v1431
        %v1434 = vmul.bf16 %v1357, 1069105081
        %v1435 = vpow.bf16.pop %v1434
        %v1437 = vmul.bf16 %v1358, 1069105081
        %v1438 = vpow.bf16.pop %v1437
        %v1440 = vmul.bf16 %v1359, 1069105081
        %v1441 = vpow.bf16.pop %v1440
        %v1443 = vmul.bf16 %v1360, 1069105081
        %v1444 = vpow.bf16.pop %v1443
        %v1446 = vmul.bf16 %v1361, 1069105081
        %v1447 = vpow.bf16.pop %v1446
        %v1449 = vmul.bf16 %v1362, 1069105081
        %v1450 = vpow.bf16.pop %v1449
        %v1452 = vmul.bf16 %v1363, 1069105081
        %v1453 = vpow.bf16.pop %v1452
        %v1455 = vmul.bf16 %v1364, 1069105081
        %v1456 = vpow.bf16.pop %v1455
        %v1458 = vmul.bf16 %v1365, 1069105081
        %v1459 = vpow.bf16.pop %v1458
        %v1461 = vmul.bf16 %v1366, 1069105081
        %v1462 = vpow.bf16.pop %v1461
        %v1463 = vadd.bf16 %v1369, 1065369472
        %v1464 = vadd.bf16 %v1372, 1065369472
        %v1465 = vadd.bf16 %v1375, 1065369472
        %v1466 = vadd.bf16 %v1378, 1065369472
        %v1467 = vadd.bf16 %v1381, 1065369472
        %v1468 = vadd.bf16 %v1384, 1065369472
        %v1469 = vadd.bf16 %v1387, 1065369472
        %v1470 = vadd.bf16 %v1390, 1065369472
        %v1471 = vadd.bf16 %v1393, 1065369472
        %v1472 = vadd.bf16 %v1396, 1065369472
        %v1473 = vadd.bf16 %v1399, 1065369472
        %v1474 = vadd.bf16 %v1402, 1065369472
        %v1475 = vadd.bf16 %v1405, 1065369472
        %v1476 = vadd.bf16 %v1408, 1065369472
        %v1477 = vadd.bf16 %v1411, 1065369472
        %v1478 = vadd.bf16 %v1414, 1065369472
        %v1479 = vadd.bf16 %v1417, 1065369472
        %v1480 = vadd.bf16 %v1420, 1065369472
        %v1481 = vadd.bf16 %v1423, 1065369472
        %v1482 = vadd.bf16 %v1426, 1065369472
        %v1483 = vadd.bf16 %v1429, 1065369472
        %v1484 = vadd.bf16 %v1432, 1065369472
        %v1485 = vadd.bf16 %v1435, 1065369472
        %v1486 = vadd.bf16 %v1438, 1065369472
        %v1487 = vadd.bf16 %v1441, 1065369472
        %v1488 = vadd.bf16 %v1444, 1065369472
        %v1489 = vadd.bf16 %v1447, 1065369472
        %v1490 = vadd.bf16 %v1450, 1065369472
        %v1491 = vadd.bf16 %v1453, 1065369472
        %v1492 = vadd.bf16 %v1456, 1065369472
        %v1493 = vadd.bf16 %v1459, 1065369472
        %v1494 = vadd.bf16 %v1462, 1065369472
        %v1495 = vrcp.bf16.pop %v1463
        %v1496 = vmul.bf16 1065369472, %v1495
        %v1497 = vrcp.bf16.pop %v1464
        %v1498 = vmul.bf16 1065369472, %v1497
        %v1499 = vrcp.bf16.pop %v1465
        %v1500 = vmul.bf16 1065369472, %v1499
        %v1501 = vrcp.bf16.pop %v1466
        %v1502 = vmul.bf16 1065369472, %v1501
        %v1503 = vrcp.bf16.pop %v1467
        %v1504 = vmul.bf16 1065369472, %v1503
        %v1505 = vrcp.bf16.pop %v1468
        %v1506 = vmul.bf16 1065369472, %v1505
        %v1507 = vrcp.bf16.pop %v1469
        %v1508 = vmul.bf16 1065369472, %v1507
        %v1509 = vrcp.bf16.pop %v1470
        %v1510 = vmul.bf16 1065369472, %v1509
        %v1511 = vrcp.bf16.pop %v1471
        %v1512 = vmul.bf16 1065369472, %v1511
        %v1513 = vrcp.bf16.pop %v1472
        %v1514 = vmul.bf16 1065369472, %v1513
        %v1515 = vrcp.bf16.pop %v1473
        %v1516 = vmul.bf16 1065369472, %v1515
        %v1517 = vrcp.bf16.pop %v1474
        %v1518 = vmul.bf16 1065369472, %v1517
        %v1519 = vrcp.bf16.pop %v1475
        %v1520 = vmul.bf16 1065369472, %v1519
        %v1521 = vrcp.bf16.pop %v1476
        %v1522 = vmul.bf16 1065369472, %v1521
        %v1523 = vrcp.bf16.pop %v1477
        %v1524 = vmul.bf16 1065369472, %v1523
        %v1525 = vrcp.bf16.pop %v1478
        %v1526 = vmul.bf16 1065369472, %v1525
        %v1527 = vrcp.bf16.pop %v1479
        %v1528 = vmul.bf16 1065369472, %v1527
        %v1529 = vrcp.bf16.pop %v1480
        %v1530 = vmul.bf16 1065369472, %v1529
        %v1531 = vrcp.bf16.pop %v1481
        %v1532 = vmul.bf16 1065369472, %v1531
        %v1533 = vrcp.bf16.pop %v1482
        %v1534 = vmul.bf16 1065369472, %v1533
        %v1535 = vrcp.bf16.pop %v1483
        %v1536 = vmul.bf16 1065369472, %v1535
        %v1537 = vrcp.bf16.pop %v1484
        %v1538 = vmul.bf16 1065369472, %v1537
        %v1539 = vrcp.bf16.pop %v1485
        %v1540 = vmul.bf16 1065369472, %v1539
        %v1541 = vrcp.bf16.pop %v1486
        %v1542 = vmul.bf16 1065369472, %v1541
        %v1543 = vrcp.bf16.pop %v1487
        %v1544 = vmul.bf16 1065369472, %v1543
        %v1545 = vrcp.bf16.pop %v1488
        %v1546 = vmul.bf16 1065369472, %v1545
        %v1547 = vrcp.bf16.pop %v1489
        %v1548 = vmul.bf16 1065369472, %v1547
        %v1549 = vrcp.bf16.pop %v1490
        %v1550 = vmul.bf16 1065369472, %v1549
        %v1551 = vrcp.bf16.pop %v1491
        %v1552 = vmul.bf16 1065369472, %v1551
        %v1553 = vrcp.bf16.pop %v1492
        %v1554 = vmul.bf16 1065369472, %v1553
        %v1555 = vrcp.bf16.pop %v1493
        %v1556 = vmul.bf16 1065369472, %v1555
        %v1557 = vrcp.bf16.pop %v1494
        %v1558 = vmul.bf16 1065369472, %v1557
        %v1559 = vmul.bf16 %v1303, %v1496
        %v1560 = vmul.bf16 %v1304, %v1498
        %v1561 = vmul.bf16 %v1305, %v1500
        %v1562 = vmul.bf16 %v1306, %v1502
        %v1563 = vmul.bf16 %v1307, %v1504
        %v1564 = vmul.bf16 %v1308, %v1506
        %v1565 = vmul.bf16 %v1309, %v1508
        %v1566 = vmul.bf16 %v1310, %v1510
        %v1567 = vmul.bf16 %v1311, %v1512
        %v1568 = vmul.bf16 %v1312, %v1514
        %v1569 = vmul.bf16 %v1313, %v1516
        %v1570 = vmul.bf16 %v1314, %v1518
        %v1571 = vmul.bf16 %v1315, %v1520
        %v1572 = vmul.bf16 %v1316, %v1522
        %v1573 = vmul.bf16 %v1317, %v1524
        %v1574 = vmul.bf16 %v1318, %v1526
        %v1575 = vmul.bf16 %v1319, %v1528
        %v1576 = vmul.bf16 %v1320, %v1530
        %v1577 = vmul.bf16 %v1321, %v1532
        %v1578 = vmul.bf16 %v1322, %v1534
        %v1579 = vmul.bf16 %v1323, %v1536
        %v1580 = vmul.bf16 %v1324, %v1538
        %v1581 = vmul.bf16 %v1325, %v1540
        %v1582 = vmul.bf16 %v1326, %v1542
        %v1583 = vmul.bf16 %v1327, %v1544
        %v1584 = vmul.bf16 %v1328, %v1546
        %v1585 = vmul.bf16 %v1329, %v1548
        %v1586 = vmul.bf16 %v1330, %v1550
        %v1587 = vmul.bf16 %v1331, %v1552
        %v1588 = vmul.bf16 %v1332, %v1554
        %v1589 = vmul.bf16 %v1333, %v1556
        %v1590 = vmul.bf16 %v1334, %v1558
        %v1591 = vld [vmem:[%s5] sm:$0x1]
        %1592 = vmatprep.subr.bf16.mxu0 %v1588
        %1593 = vmatpush1.bf16.msra.mxu0 %v1587
        %1594 = vmatprep.subr.bf16.mxu0 %v1584
        %1595 = vmatpush1.bf16.msra.mxu0 %v1583
        %1596 = vmatprep.subr.bf16.mxu0 %v1580
        %1597 = vmatpush1.bf16.msra.mxu0 %v1579
        %1598 = vmatprep.subr.bf16.mxu0 %v1576
        %1599 = vmatpush1.bf16.msra.mxu0 %v1575
        %1600 = vmatprep.subr.bf16.mxu0 %v1572
        %1601 = vmatpush1.bf16.msra.mxu0 %v1571
        %1602 = vmatprep.subr.bf16.mxu0 %v1568
        %1603 = vmatpush1.bf16.msra.mxu0 %v1567
        %1604 = vmatprep.subr.bf16.mxu0 %v1564
        %1605 = vmatpush1.bf16.msra.mxu0 %v1563
        %1606 = vmatprep.subr.bf16.mxu0 %v1560
        %1607 = vmatpush1.bf16.msra.mxu0 %v1559
        %1608 = vmatprep.subr.bf16.mxu0 0
        %1609 = vmatpush2.bf16.msra.mxu0 0
        %1610 = vmatprep.subr.bf16.mxu0 0
        %1611 = vmatpush2.bf16.msra.mxu0 0
        %1612 = vmatprep.subr.bf16.mxu0 0
        %1613 = vmatpush2.bf16.msra.mxu0 0
        %1614 = vmatprep.subr.bf16.mxu0 0
        %1615 = vmatpush2.bf16.msra.mxu0 0
        %1616 = vmatprep.subr.bf16.mxu0 0
        %1617 = vmatpush2.bf16.msra.mxu0 0
        %1618 = vmatprep.subr.bf16.mxu0 0
        %1619 = vmatpush2.bf16.msra.mxu0 0
        %1620 = vmatprep.subr.bf16.mxu0 0
        %1621 = vmatpush2.bf16.msra.mxu0 0
        %1622 = vmatprep.subr.bf16.mxu0 0
        %1623 = vmatpush2.bf16.msra.mxu0 0
        %1624 = vmatprep.mubr.bf16.mxu0 0
        %1625 = vmatmul.mubr.bf16.gmra.mxu0 %v1591
        %v1626 = vpop.f32.mrf.mxu0
        %v1627 = vadd.f32 0.0, %v1626
        %v1628 = vpop.f32.mrf.mxu0
        %v1629 = vadd.f32 0.0, %v1628
        %v1630 = vpop.f32.mrf.mxu0
        %v1631 = vpop.f32.mrf.mxu0
        %1632 = vdwg.mxu0
        %1633 = vmatprep.subr.bf16.mxu0 %v1590
        %1634 = vmatpush1.bf16.msra.mxu0 %v1589
        %1635 = vmatprep.subr.bf16.mxu0 %v1586
        %1636 = vmatpush1.bf16.msra.mxu0 %v1585
        %1637 = vmatprep.subr.bf16.mxu0 %v1582
        %1638 = vmatpush1.bf16.msra.mxu0 %v1581
        %1639 = vmatprep.subr.bf16.mxu0 %v1578
        %1640 = vmatpush1.bf16.msra.mxu0 %v1577
        %1641 = vmatprep.subr.bf16.mxu0 %v1574
        %1642 = vmatpush1.bf16.msra.mxu0 %v1573
        %1643 = vmatprep.subr.bf16.mxu0 %v1570
        %1644 = vmatpush1.bf16.msra.mxu0 %v1569
        %1645 = vmatprep.subr.bf16.mxu0 %v1566
        %1646 = vmatpush1.bf16.msra.mxu0 %v1565
        %1647 = vmatprep.subr.bf16.mxu0 %v1562
        %1648 = vmatpush1.bf16.msra.mxu0 %v1561
        %1649 = vmatprep.subr.bf16.mxu0 0
        %1650 = vmatpush2.bf16.msra.mxu0 0
        %1651 = vmatprep.subr.bf16.mxu0 0
        %1652 = vmatpush2.bf16.msra.mxu0 0
        %1653 = vmatprep.subr.bf16.mxu0 0
        %1654 = vmatpush2.bf16.msra.mxu0 0
        %1655 = vmatprep.subr.bf16.mxu0 0
        %1656 = vmatpush2.bf16.msra.mxu0 0
        %1657 = vmatprep.subr.bf16.mxu0 0
        %1658 = vmatpush2.bf16.msra.mxu0 0
        %1659 = vmatprep.subr.bf16.mxu0 0
        %1660 = vmatpush2.bf16.msra.mxu0 0
        %1661 = vmatprep.subr.bf16.mxu0 0
        %1662 = vmatpush2.bf16.msra.mxu0 0
        %1663 = vmatprep.subr.bf16.mxu0 0
        %1664 = vmatpush2.bf16.msra.mxu0 0
        %1665 = vmatprep.mubr.bf16.mxu0 0
        %1666 = vmatmul.mubr.bf16.gmra.mxu0 %v1591
        %v1667 = vpop.f32.mrf.mxu0
        %v1668 = vadd.f32 0.0, %v1667
        %v1669 = vpop.f32.mrf.mxu0
        %v1670 = vadd.f32 0.0, %v1669
        %v1671 = vpop.f32.mrf.mxu0
        %v1672 = vpop.f32.mrf.mxu0
        %1673 = vdwg.mxu0
        %v1674 = vld [vmem:[#allocation3] sm:$0xff]
        %v1675 = vpack.c.bf16 %v1627, %v1627
        %v1676 = vpack.c.bf16 %v1629, %v1629
        %v1677 = vpack.c.bf16 %v1668, %v1668
        %v1678 = vpack.c.bf16 %v1670, %v1670
        %v1679 = vld [vmem:[%s397] sm:$0xff]
        %v1680 = vld [vmem:[%s397 + $0x8] sm:$0xff]
        %v1681 = vld [vmem:[%s397 + $0x10] sm:$0xff]
        %v1682 = vld [vmem:[%s397 + $0x18] sm:$0xff]
        %v1683 = vld [vmem:[%s397 + $0x20] sm:$0xff]
        %v1684 = vld [vmem:[%s397 + $0x28] sm:$0xff]
        %v1685 = vld [vmem:[%s397 + $0x30] sm:$0xff]
        %v1686 = vld [vmem:[%s397 + $0x38] sm:$0xff]
        %v1687 = vld [vmem:[%s397 + $0x40] sm:$0xff]
        %v1688 = vld [vmem:[%s397 + $0x48] sm:$0xff]
        %v1689 = vld [vmem:[%s397 + $0x50] sm:$0xff]
        %v1690 = vld [vmem:[%s397 + $0x58] sm:$0xff]
        %v1691 = vld [vmem:[%s397 + $0x60] sm:$0xff]
        %v1692 = vld [vmem:[%s397 + $0x68] sm:$0xff]
        %v1693 = vld [vmem:[%s397 + $0x70] sm:$0xff]
        %v1694 = vld [vmem:[%s397 + $0x78] sm:$0xff]
        %v1695 = vld [vmem:[%s397 + $0x80] sm:$0xff]
        %v1696 = vld [vmem:[%s397 + $0x88] sm:$0xff]
        %v1697 = vld [vmem:[%s397 + $0x90] sm:$0xff]
        %v1698 = vld [vmem:[%s397 + $0x98] sm:$0xff]
        %v1699 = vld [vmem:[%s397 + $0xa0] sm:$0xff]
        %v1700 = vld [vmem:[%s397 + $0xa8] sm:$0xff]
        %v1701 = vld [vmem:[%s397 + $0xb0] sm:$0xff]
        %v1702 = vld [vmem:[%s397 + $0xb8] sm:$0xff]
        %v1703 = vld [vmem:[%s397 + $0xc0] sm:$0xff]
        %v1704 = vld [vmem:[%s397 + $0xc8] sm:$0xff]
        %v1705 = vld [vmem:[%s397 + $0xd0] sm:$0xff]
        %v1706 = vld [vmem:[%s397 + $0xd8] sm:$0xff]
        %v1707 = vld [vmem:[%s397 + $0xe0] sm:$0xff]
        %v1708 = vld [vmem:[%s397 + $0xe8] sm:$0xff]
        %v1709 = vld [vmem:[%s397 + $0xf0] sm:$0xff]
        %v1710 = vld [vmem:[%s397 + $0xf8] sm:$0xff]
        %v1711 = vld [vmem:[%s397 + $0x100] sm:$0xff]
        %v1712 = vld [vmem:[%s397 + $0x108] sm:$0xff]
        %v1713 = vld [vmem:[%s397 + $0x110] sm:$0xff]
        %v1714 = vld [vmem:[%s397 + $0x118] sm:$0xff]
        %v1715 = vld [vmem:[%s397 + $0x120] sm:$0xff]
        %v1716 = vld [vmem:[%s397 + $0x128] sm:$0xff]
        %v1717 = vld [vmem:[%s397 + $0x130] sm:$0xff]
        %v1718 = vld [vmem:[%s397 + $0x138] sm:$0xff]
        %v1719 = vld [vmem:[%s397 + $0x140] sm:$0xff]
        %v1720 = vld [vmem:[%s397 + $0x148] sm:$0xff]
        %v1721 = vld [vmem:[%s397 + $0x150] sm:$0xff]
        %v1722 = vld [vmem:[%s397 + $0x158] sm:$0xff]
        %v1723 = vld [vmem:[%s397 + $0x160] sm:$0xff]
        %v1724 = vld [vmem:[%s397 + $0x168] sm:$0xff]
        %v1725 = vld [vmem:[%s397 + $0x170] sm:$0xff]
        %v1726 = vld [vmem:[%s397 + $0x178] sm:$0xff]
        %v1727 = vld [vmem:[%s397 + $0x180] sm:$0xff]
        %v1728 = vld [vmem:[%s397 + $0x188] sm:$0xff]
        %v1729 = vld [vmem:[%s397 + $0x190] sm:$0xff]
        %v1730 = vld [vmem:[%s397 + $0x198] sm:$0xff]
        %v1731 = vld [vmem:[%s397 + $0x1a0] sm:$0xff]
        %v1732 = vld [vmem:[%s397 + $0x1a8] sm:$0xff]
        %v1733 = vld [vmem:[%s397 + $0x1b0] sm:$0xff]
        %v1734 = vld [vmem:[%s397 + $0x1b8] sm:$0xff]
        %v1735 = vld [vmem:[%s397 + $0x1c0] sm:$0xff]
        %v1736 = vld [vmem:[%s397 + $0x1c8] sm:$0xff]
        %v1737 = vld [vmem:[%s397 + $0x1d0] sm:$0xff]
        %v1738 = vld [vmem:[%s397 + $0x1d8] sm:$0xff]
        %v1739 = vld [vmem:[%s397 + $0x1e0] sm:$0xff]
        %v1740 = vld [vmem:[%s397 + $0x1e8] sm:$0xff]
        %v1741 = vld [vmem:[%s397 + $0x1f0] sm:$0xff]
        %v1742 = vld [vmem:[%s397 + $0x1f8] sm:$0xff]
        %v1743 = vld [vmem:[%s397 + $0x200] sm:$0xff]
        %v1744 = vld [vmem:[%s397 + $0x208] sm:$0xff]
        %v1745 = vld [vmem:[%s397 + $0x210] sm:$0xff]
        %v1746 = vld [vmem:[%s397 + $0x218] sm:$0xff]
        %v1747 = vld [vmem:[%s397 + $0x220] sm:$0xff]
        %v1748 = vld [vmem:[%s397 + $0x228] sm:$0xff]
        %v1749 = vld [vmem:[%s397 + $0x230] sm:$0xff]
        %v1750 = vld [vmem:[%s397 + $0x238] sm:$0xff]
        %v1751 = vld [vmem:[%s397 + $0x240] sm:$0xff]
        %v1752 = vld [vmem:[%s397 + $0x248] sm:$0xff]
        %v1753 = vld [vmem:[%s397 + $0x250] sm:$0xff]
        %v1754 = vld [vmem:[%s397 + $0x258] sm:$0xff]
        %v1755 = vld [vmem:[%s397 + $0x260] sm:$0xff]
        %v1756 = vld [vmem:[%s397 + $0x268] sm:$0xff]
        %v1757 = vld [vmem:[%s397 + $0x270] sm:$0xff]
        %v1758 = vld [vmem:[%s397 + $0x278] sm:$0xff]
        %v1759 = vld [vmem:[%s397 + $0x280] sm:$0xff]
        %v1760 = vld [vmem:[%s397 + $0x288] sm:$0xff]
        %v1761 = vld [vmem:[%s397 + $0x290] sm:$0xff]
        %v1762 = vld [vmem:[%s397 + $0x298] sm:$0xff]
        %v1763 = vld [vmem:[%s397 + $0x2a0] sm:$0xff]
        %v1764 = vld [vmem:[%s397 + $0x2a8] sm:$0xff]
        %v1765 = vld [vmem:[%s397 + $0x2b0] sm:$0xff]
        %v1766 = vld [vmem:[%s397 + $0x2b8] sm:$0xff]
        %v1767 = vld [vmem:[%s397 + $0x2c0] sm:$0xff]
        %v1768 = vld [vmem:[%s397 + $0x2c8] sm:$0xff]
        %v1769 = vld [vmem:[%s397 + $0x2d0] sm:$0xff]
        %v1770 = vld [vmem:[%s397 + $0x2d8] sm:$0xff]
        %v1771 = vld [vmem:[%s397 + $0x2e0] sm:$0xff]
        %v1772 = vld [vmem:[%s397 + $0x2e8] sm:$0xff]
        %v1773 = vld [vmem:[%s397 + $0x2f0] sm:$0xff]
        %v1774 = vld [vmem:[%s397 + $0x2f8] sm:$0xff]
        %v1775 = vld [vmem:[%s397 + $0x300] sm:$0xff]
        %v1776 = vld [vmem:[%s397 + $0x308] sm:$0xff]
        %v1777 = vld [vmem:[%s397 + $0x310] sm:$0xff]
        %v1778 = vld [vmem:[%s397 + $0x318] sm:$0xff]
        %v1779 = vld [vmem:[%s397 + $0x320] sm:$0xff]
        %v1780 = vld [vmem:[%s397 + $0x328] sm:$0xff]
        %v1781 = vld [vmem:[%s397 + $0x330] sm:$0xff]
        %v1782 = vld [vmem:[%s397 + $0x338] sm:$0xff]
        %v1783 = vld [vmem:[%s397 + $0x340] sm:$0xff]
        %v1784 = vld [vmem:[%s397 + $0x348] sm:$0xff]
        %v1785 = vld [vmem:[%s397 + $0x350] sm:$0xff]
        %v1786 = vld [vmem:[%s397 + $0x358] sm:$0xff]
        %v1787 = vld [vmem:[%s397 + $0x360] sm:$0xff]
        %v1788 = vld [vmem:[%s397 + $0x368] sm:$0xff]
        %v1789 = vld [vmem:[%s397 + $0x370] sm:$0xff]
        %v1790 = vld [vmem:[%s397 + $0x378] sm:$0xff]
        %v1791 = vld [vmem:[%s397 + $0x380] sm:$0xff]
        %v1792 = vld [vmem:[%s397 + $0x388] sm:$0xff]
        %v1793 = vld [vmem:[%s397 + $0x390] sm:$0xff]
        %v1794 = vld [vmem:[%s397 + $0x398] sm:$0xff]
        %v1795 = vld [vmem:[%s397 + $0x3a0] sm:$0xff]
        %v1796 = vld [vmem:[%s397 + $0x3a8] sm:$0xff]
        %v1797 = vld [vmem:[%s397 + $0x3b0] sm:$0xff]
        %v1798 = vld [vmem:[%s397 + $0x3b8] sm:$0xff]
        %v1799 = vld [vmem:[%s397 + $0x3c0] sm:$0xff]
        %v1800 = vld [vmem:[%s397 + $0x3c8] sm:$0xff]
        %v1801 = vld [vmem:[%s397 + $0x3d0] sm:$0xff]
        %v1802 = vld [vmem:[%s397 + $0x3d8] sm:$0xff]
        %v1803 = vld [vmem:[%s397 + $0x3e0] sm:$0xff]
        %v1804 = vld [vmem:[%s397 + $0x3e8] sm:$0xff]
        %v1805 = vld [vmem:[%s397 + $0x3f0] sm:$0xff]
        %v1806 = vld [vmem:[%s397 + $0x3f8] sm:$0xff]
        %v1935 = vunpack.c.l.b16 %v1679
        %v1936 = vunpack.c.h.b16 %v1679
        %v1937 = vunpack.c.l.b16 %v1680
        %v1938 = vunpack.c.h.b16 %v1680
        %v1939 = vunpack.c.l.b16 %v1681
        %v1940 = vunpack.c.h.b16 %v1681
        %v1941 = vunpack.c.l.b16 %v1682
        %v1942 = vunpack.c.h.b16 %v1682
        %v1943 = vunpack.c.l.b16 %v1683
        %v1944 = vunpack.c.h.b16 %v1683
        %v1945 = vunpack.c.l.b16 %v1684
        %v1946 = vunpack.c.h.b16 %v1684
        %v1947 = vunpack.c.l.b16 %v1685
        %v1948 = vunpack.c.h.b16 %v1685
        %v1949 = vunpack.c.l.b16 %v1686
        %v1950 = vunpack.c.h.b16 %v1686
        %v1951 = vunpack.c.l.b16 %v1687
        %v1952 = vunpack.c.h.b16 %v1687
        %v1953 = vunpack.c.l.b16 %v1688
        %v1954 = vunpack.c.h.b16 %v1688
        %v1955 = vunpack.c.l.b16 %v1689
        %v1956 = vunpack.c.h.b16 %v1689
        %v1957 = vunpack.c.l.b16 %v1690
        %v1958 = vunpack.c.h.b16 %v1690
        %v1959 = vunpack.c.l.b16 %v1691
        %v1960 = vunpack.c.h.b16 %v1691
        %v1961 = vunpack.c.l.b16 %v1692
        %v1962 = vunpack.c.h.b16 %v1692
        %v1963 = vunpack.c.l.b16 %v1693
        %v1964 = vunpack.c.h.b16 %v1693
        %v1965 = vunpack.c.l.b16 %v1694
        %v1966 = vunpack.c.h.b16 %v1694
        %v1967 = vunpack.c.l.b16 %v1695
        %v1968 = vunpack.c.h.b16 %v1695
        %v1969 = vunpack.c.l.b16 %v1696
        %v1970 = vunpack.c.h.b16 %v1696
        %v1971 = vunpack.c.l.b16 %v1697
        %v1972 = vunpack.c.h.b16 %v1697
        %v1973 = vunpack.c.l.b16 %v1698
        %v1974 = vunpack.c.h.b16 %v1698
        %v1975 = vunpack.c.l.b16 %v1699
        %v1976 = vunpack.c.h.b16 %v1699
        %v1977 = vunpack.c.l.b16 %v1700
        %v1978 = vunpack.c.h.b16 %v1700
        %v1979 = vunpack.c.l.b16 %v1701
        %v1980 = vunpack.c.h.b16 %v1701
        %v1981 = vunpack.c.l.b16 %v1702
        %v1982 = vunpack.c.h.b16 %v1702
        %v1983 = vunpack.c.l.b16 %v1703
        %v1984 = vunpack.c.h.b16 %v1703
        %v1985 = vunpack.c.l.b16 %v1704
        %v1986 = vunpack.c.h.b16 %v1704
        %v1987 = vunpack.c.l.b16 %v1705
        %v1988 = vunpack.c.h.b16 %v1705
        %v1989 = vunpack.c.l.b16 %v1706
        %v1990 = vunpack.c.h.b16 %v1706
        %v1991 = vunpack.c.l.b16 %v1707
        %v1992 = vunpack.c.h.b16 %v1707
        %v1993 = vunpack.c.l.b16 %v1708
        %v1994 = vunpack.c.h.b16 %v1708
        %v1995 = vunpack.c.l.b16 %v1709
        %v1996 = vunpack.c.h.b16 %v1709
        %v1997 = vunpack.c.l.b16 %v1710
        %v1998 = vunpack.c.h.b16 %v1710
        %v1999 = vunpack.c.l.b16 %v1711
        %v2000 = vunpack.c.h.b16 %v1711
        %v2001 = vunpack.c.l.b16 %v1712
        %v2002 = vunpack.c.h.b16 %v1712
        %v2003 = vunpack.c.l.b16 %v1713
        %v2004 = vunpack.c.h.b16 %v1713
        %v2005 = vunpack.c.l.b16 %v1714
        %v2006 = vunpack.c.h.b16 %v1714
        %v2007 = vunpack.c.l.b16 %v1715
        %v2008 = vunpack.c.h.b16 %v1715
        %v2009 = vunpack.c.l.b16 %v1716
        %v2010 = vunpack.c.h.b16 %v1716
        %v2011 = vunpack.c.l.b16 %v1717
        %v2012 = vunpack.c.h.b16 %v1717
        %v2013 = vunpack.c.l.b16 %v1718
        %v2014 = vunpack.c.h.b16 %v1718
        %v2015 = vunpack.c.l.b16 %v1719
        %v2016 = vunpack.c.h.b16 %v1719
        %v2017 = vunpack.c.l.b16 %v1720
        %v2018 = vunpack.c.h.b16 %v1720
        %v2019 = vunpack.c.l.b16 %v1721
        %v2020 = vunpack.c.h.b16 %v1721
        %v2021 = vunpack.c.l.b16 %v1722
        %v2022 = vunpack.c.h.b16 %v1722
        %v2023 = vunpack.c.l.b16 %v1723
        %v2024 = vunpack.c.h.b16 %v1723
        %v2025 = vunpack.c.l.b16 %v1724
        %v2026 = vunpack.c.h.b16 %v1724
        %v2027 = vunpack.c.l.b16 %v1725
        %v2028 = vunpack.c.h.b16 %v1725
        %v2029 = vunpack.c.l.b16 %v1726
        %v2030 = vunpack.c.h.b16 %v1726
        %v2031 = vunpack.c.l.b16 %v1727
        %v2032 = vunpack.c.h.b16 %v1727
        %v2033 = vunpack.c.l.b16 %v1728
        %v2034 = vunpack.c.h.b16 %v1728
        %v2035 = vunpack.c.l.b16 %v1729
        %v2036 = vunpack.c.h.b16 %v1729
        %v2037 = vunpack.c.l.b16 %v1730
        %v2038 = vunpack.c.h.b16 %v1730
        %v2039 = vunpack.c.l.b16 %v1731
        %v2040 = vunpack.c.h.b16 %v1731
        %v2041 = vunpack.c.l.b16 %v1732
        %v2042 = vunpack.c.h.b16 %v1732
        %v2043 = vunpack.c.l.b16 %v1733
        %v2044 = vunpack.c.h.b16 %v1733
        %v2045 = vunpack.c.l.b16 %v1734
        %v2046 = vunpack.c.h.b16 %v1734
        %v2047 = vunpack.c.l.b16 %v1735
        %v2048 = vunpack.c.h.b16 %v1735
        %v2049 = vunpack.c.l.b16 %v1736
        %v2050 = vunpack.c.h.b16 %v1736
        %v2051 = vunpack.c.l.b16 %v1737
        %v2052 = vunpack.c.h.b16 %v1737
        %v2053 = vunpack.c.l.b16 %v1738
        %v2054 = vunpack.c.h.b16 %v1738
        %v2055 = vunpack.c.l.b16 %v1739
        %v2056 = vunpack.c.h.b16 %v1739
        %v2057 = vunpack.c.l.b16 %v1740
        %v2058 = vunpack.c.h.b16 %v1740
        %v2059 = vunpack.c.l.b16 %v1741
        %v2060 = vunpack.c.h.b16 %v1741
        %v2061 = vunpack.c.l.b16 %v1742
        %v2062 = vunpack.c.h.b16 %v1742
        %v2063 = vunpack.c.l.b16 %v1743
        %v2064 = vunpack.c.h.b16 %v1743
        %v2065 = vunpack.c.l.b16 %v1744
        %v2066 = vunpack.c.h.b16 %v1744
        %v2067 = vunpack.c.l.b16 %v1745
        %v2068 = vunpack.c.h.b16 %v1745
        %v2069 = vunpack.c.l.b16 %v1746
        %v2070 = vunpack.c.h.b16 %v1746
        %v2071 = vunpack.c.l.b16 %v1747
        %v2072 = vunpack.c.h.b16 %v1747
        %v2073 = vunpack.c.l.b16 %v1748
        %v2074 = vunpack.c.h.b16 %v1748
        %v2075 = vunpack.c.l.b16 %v1749
        %v2076 = vunpack.c.h.b16 %v1749
        %v2077 = vunpack.c.l.b16 %v1750
        %v2078 = vunpack.c.h.b16 %v1750
        %v2079 = vunpack.c.l.b16 %v1751
        %v2080 = vunpack.c.h.b16 %v1751
        %v2081 = vunpack.c.l.b16 %v1752
        %v2082 = vunpack.c.h.b16 %v1752
        %v2083 = vunpack.c.l.b16 %v1753
        %v2084 = vunpack.c.h.b16 %v1753
        %v2085 = vunpack.c.l.b16 %v1754
        %v2086 = vunpack.c.h.b16 %v1754
        %v2087 = vunpack.c.l.b16 %v1755
        %v2088 = vunpack.c.h.b16 %v1755
        %v2089 = vunpack.c.l.b16 %v1756
        %v2090 = vunpack.c.h.b16 %v1756
        %v2091 = vunpack.c.l.b16 %v1757
        %v2092 = vunpack.c.h.b16 %v1757
        %v2093 = vunpack.c.l.b16 %v1758
        %v2094 = vunpack.c.h.b16 %v1758
        %v2095 = vunpack.c.l.b16 %v1759
        %v2096 = vunpack.c.h.b16 %v1759
        %v2097 = vunpack.c.l.b16 %v1760
        %v2098 = vunpack.c.h.b16 %v1760
        %v2099 = vunpack.c.l.b16 %v1761
        %v2100 = vunpack.c.h.b16 %v1761
        %v2101 = vunpack.c.l.b16 %v1762
        %v2102 = vunpack.c.h.b16 %v1762
        %v2103 = vunpack.c.l.b16 %v1763
        %v2104 = vunpack.c.h.b16 %v1763
        %v2105 = vunpack.c.l.b16 %v1764
        %v2106 = vunpack.c.h.b16 %v1764
        %v2107 = vunpack.c.l.b16 %v1765
        %v2108 = vunpack.c.h.b16 %v1765
        %v2109 = vunpack.c.l.b16 %v1766
        %v2110 = vunpack.c.h.b16 %v1766
        %v2111 = vunpack.c.l.b16 %v1767
        %v2112 = vunpack.c.h.b16 %v1767
        %v2113 = vunpack.c.l.b16 %v1768
        %v2114 = vunpack.c.h.b16 %v1768
        %v2115 = vunpack.c.l.b16 %v1769
        %v2116 = vunpack.c.h.b16 %v1769
        %v2117 = vunpack.c.l.b16 %v1770
        %v2118 = vunpack.c.h.b16 %v1770
        %v2119 = vunpack.c.l.b16 %v1771
        %v2120 = vunpack.c.h.b16 %v1771
        %v2121 = vunpack.c.l.b16 %v1772
        %v2122 = vunpack.c.h.b16 %v1772
        %v2123 = vunpack.c.l.b16 %v1773
        %v2124 = vunpack.c.h.b16 %v1773
        %v2125 = vunpack.c.l.b16 %v1774
        %v2126 = vunpack.c.h.b16 %v1774
        %v2127 = vunpack.c.l.b16 %v1775
        %v2128 = vunpack.c.h.b16 %v1775
        %v2129 = vunpack.c.l.b16 %v1776
        %v2130 = vunpack.c.h.b16 %v1776
        %v2131 = vunpack.c.l.b16 %v1777
        %v2132 = vunpack.c.h.b16 %v1777
        %v2133 = vunpack.c.l.b16 %v1778
        %v2134 = vunpack.c.h.b16 %v1778
        %v2135 = vunpack.c.l.b16 %v1779
        %v2136 = vunpack.c.h.b16 %v1779
        %v2137 = vunpack.c.l.b16 %v1780
        %v2138 = vunpack.c.h.b16 %v1780
        %v2139 = vunpack.c.l.b16 %v1781
        %v2140 = vunpack.c.h.b16 %v1781
        %v2141 = vunpack.c.l.b16 %v1782
        %v2142 = vunpack.c.h.b16 %v1782
        %v2143 = vunpack.c.l.b16 %v1783
        %v2144 = vunpack.c.h.b16 %v1783
        %v2145 = vunpack.c.l.b16 %v1784
        %v2146 = vunpack.c.h.b16 %v1784
        %v2147 = vunpack.c.l.b16 %v1785
        %v2148 = vunpack.c.h.b16 %v1785
        %v2149 = vunpack.c.l.b16 %v1786
        %v2150 = vunpack.c.h.b16 %v1786
        %v2151 = vunpack.c.l.b16 %v1787
        %v2152 = vunpack.c.h.b16 %v1787
        %v2153 = vunpack.c.l.b16 %v1788
        %v2154 = vunpack.c.h.b16 %v1788
        %v2155 = vunpack.c.l.b16 %v1789
        %v2156 = vunpack.c.h.b16 %v1789
        %v2157 = vunpack.c.l.b16 %v1790
        %v2158 = vunpack.c.h.b16 %v1790
        %v2159 = vunpack.c.l.b16 %v1791
        %v2160 = vunpack.c.h.b16 %v1791
        %v2161 = vunpack.c.l.b16 %v1792
        %v2162 = vunpack.c.h.b16 %v1792
        %v2163 = vunpack.c.l.b16 %v1793
        %v2164 = vunpack.c.h.b16 %v1793
        %v2165 = vunpack.c.l.b16 %v1794
        %v2166 = vunpack.c.h.b16 %v1794
        %v2167 = vunpack.c.l.b16 %v1795
        %v2168 = vunpack.c.h.b16 %v1795
        %v2169 = vunpack.c.l.b16 %v1796
        %v2170 = vunpack.c.h.b16 %v1796
        %v2171 = vunpack.c.l.b16 %v1797
        %v2172 = vunpack.c.h.b16 %v1797
        %v2173 = vunpack.c.l.b16 %v1798
        %v2174 = vunpack.c.h.b16 %v1798
        %v2175 = vunpack.c.l.b16 %v1799
        %v2176 = vunpack.c.h.b16 %v1799
        %v2177 = vunpack.c.l.b16 %v1800
        %v2178 = vunpack.c.h.b16 %v1800
        %v2179 = vunpack.c.l.b16 %v1801
        %v2180 = vunpack.c.h.b16 %v1801
        %v2181 = vunpack.c.l.b16 %v1802
        %v2182 = vunpack.c.h.b16 %v1802
        %v2183 = vunpack.c.l.b16 %v1803
        %v2184 = vunpack.c.h.b16 %v1803
        %v2185 = vunpack.c.l.b16 %v1804
        %v2186 = vunpack.c.h.b16 %v1804
        %v2187 = vunpack.c.l.b16 %v1805
        %v2188 = vunpack.c.h.b16 %v1805
        %v2189 = vunpack.c.l.b16 %v1806
        %v2190 = vunpack.c.h.b16 %v1806
        %v2191 = vpack.c.b16 %v1939, %v1935
        %v2192 = vpack.c.b16 %v1940, %v1936
        %v2193 = vpack.c.b16 %v1941, %v1937
        %v2194 = vpack.c.b16 %v1942, %v1938
        %v2195 = vpack.c.b16 %v1947, %v1943
        %v2196 = vpack.c.b16 %v1948, %v1944
        %v2197 = vpack.c.b16 %v1949, %v1945
        %v2198 = vpack.c.b16 %v1950, %v1946
        %v2199 = vpack.c.b16 %v1955, %v1951
        %v2200 = vpack.c.b16 %v1956, %v1952
        %v2201 = vpack.c.b16 %v1957, %v1953
        %v2202 = vpack.c.b16 %v1958, %v1954
        %v2203 = vpack.c.b16 %v1963, %v1959
        %v2204 = vpack.c.b16 %v1964, %v1960
        %v2205 = vpack.c.b16 %v1965, %v1961
        %v2206 = vpack.c.b16 %v1966, %v1962
        %v2207 = vpack.c.b16 %v1971, %v1967
        %v2208 = vpack.c.b16 %v1972, %v1968
        %v2209 = vpack.c.b16 %v1973, %v1969
        %v2210 = vpack.c.b16 %v1974, %v1970
        %v2211 = vpack.c.b16 %v1979, %v1975
        %v2212 = vpack.c.b16 %v1980, %v1976
        %v2213 = vpack.c.b16 %v1981, %v1977
        %v2214 = vpack.c.b16 %v1982, %v1978
        %v2215 = vpack.c.b16 %v1987, %v1983
        %v2216 = vpack.c.b16 %v1988, %v1984
        %v2217 = vpack.c.b16 %v1989, %v1985
        %v2218 = vpack.c.b16 %v1990, %v1986
        %v2219 = vpack.c.b16 %v1995, %v1991
        %v2220 = vpack.c.b16 %v1996, %v1992
        %v2221 = vpack.c.b16 %v1997, %v1993
        %v2222 = vpack.c.b16 %v1998, %v1994
        %v2223 = vpack.c.b16 %v2003, %v1999
        %v2224 = vpack.c.b16 %v2004, %v2000
        %v2225 = vpack.c.b16 %v2005, %v2001
        %v2226 = vpack.c.b16 %v2006, %v2002
        %v2227 = vpack.c.b16 %v2011, %v2007
        %v2228 = vpack.c.b16 %v2012, %v2008
        %v2229 = vpack.c.b16 %v2013, %v2009
        %v2230 = vpack.c.b16 %v2014, %v2010
        %v2231 = vpack.c.b16 %v2019, %v2015
        %v2232 = vpack.c.b16 %v2020, %v2016
        %v2233 = vpack.c.b16 %v2021, %v2017
        %v2234 = vpack.c.b16 %v2022, %v2018
        %v2235 = vpack.c.b16 %v2027, %v2023
        %v2236 = vpack.c.b16 %v2028, %v2024
        %v2237 = vpack.c.b16 %v2029, %v2025
        %v2238 = vpack.c.b16 %v2030, %v2026
        %v2239 = vpack.c.b16 %v2035, %v2031
        %v2240 = vpack.c.b16 %v2036, %v2032
        %v2241 = vpack.c.b16 %v2037, %v2033
        %v2242 = vpack.c.b16 %v2038, %v2034
        %v2243 = vpack.c.b16 %v2043, %v2039
        %v2244 = vpack.c.b16 %v2044, %v2040
        %v2245 = vpack.c.b16 %v2045, %v2041
        %v2246 = vpack.c.b16 %v2046, %v2042
        %v2247 = vpack.c.b16 %v2051, %v2047
        %v2248 = vpack.c.b16 %v2052, %v2048
        %v2249 = vpack.c.b16 %v2053, %v2049
        %v2250 = vpack.c.b16 %v2054, %v2050
        %v2251 = vpack.c.b16 %v2059, %v2055
        %v2252 = vpack.c.b16 %v2060, %v2056
        %v2253 = vpack.c.b16 %v2061, %v2057
        %v2254 = vpack.c.b16 %v2062, %v2058
        %v2255 = vpack.c.b16 %v2067, %v2063
        %v2256 = vpack.c.b16 %v2068, %v2064
        %v2257 = vpack.c.b16 %v2069, %v2065
        %v2258 = vpack.c.b16 %v2070, %v2066
        %v2259 = vpack.c.b16 %v2075, %v2071
        %v2260 = vpack.c.b16 %v2076, %v2072
        %v2261 = vpack.c.b16 %v2077, %v2073
        %v2262 = vpack.c.b16 %v2078, %v2074
        %v2263 = vpack.c.b16 %v2083, %v2079
        %v2264 = vpack.c.b16 %v2084, %v2080
        %v2265 = vpack.c.b16 %v2085, %v2081
        %v2266 = vpack.c.b16 %v2086, %v2082
        %v2267 = vpack.c.b16 %v2091, %v2087
        %v2268 = vpack.c.b16 %v2092, %v2088
        %v2269 = vpack.c.b16 %v2093, %v2089
        %v2270 = vpack.c.b16 %v2094, %v2090
        %v2271 = vpack.c.b16 %v2099, %v2095
        %v2272 = vpack.c.b16 %v2100, %v2096
        %v2273 = vpack.c.b16 %v2101, %v2097
        %v2274 = vpack.c.b16 %v2102, %v2098
        %v2275 = vpack.c.b16 %v2107, %v2103
        %v2276 = vpack.c.b16 %v2108, %v2104
        %v2277 = vpack.c.b16 %v2109, %v2105
        %v2278 = vpack.c.b16 %v2110, %v2106
        %v2279 = vpack.c.b16 %v2115, %v2111
        %v2280 = vpack.c.b16 %v2116, %v2112
        %v2281 = vpack.c.b16 %v2117, %v2113
        %v2282 = vpack.c.b16 %v2118, %v2114
        %v2283 = vpack.c.b16 %v2123, %v2119
        %v2284 = vpack.c.b16 %v2124, %v2120
        %v2285 = vpack.c.b16 %v2125, %v2121
        %v2286 = vpack.c.b16 %v2126, %v2122
        %v2287 = vpack.c.b16 %v2131, %v2127
        %v2288 = vpack.c.b16 %v2132, %v2128
        %v2289 = vpack.c.b16 %v2133, %v2129
        %v2290 = vpack.c.b16 %v2134, %v2130
        %v2291 = vpack.c.b16 %v2139, %v2135
        %v2292 = vpack.c.b16 %v2140, %v2136
        %v2293 = vpack.c.b16 %v2141, %v2137
        %v2294 = vpack.c.b16 %v2142, %v2138
        %v2295 = vpack.c.b16 %v2147, %v2143
        %v2296 = vpack.c.b16 %v2148, %v2144
        %v2297 = vpack.c.b16 %v2149, %v2145
        %v2298 = vpack.c.b16 %v2150, %v2146
        %v2299 = vpack.c.b16 %v2155, %v2151
        %v2300 = vpack.c.b16 %v2156, %v2152
        %v2301 = vpack.c.b16 %v2157, %v2153
        %v2302 = vpack.c.b16 %v2158, %v2154
        %v2303 = vpack.c.b16 %v2163, %v2159
        %v2304 = vpack.c.b16 %v2164, %v2160
        %v2305 = vpack.c.b16 %v2165, %v2161
        %v2306 = vpack.c.b16 %v2166, %v2162
        %v2307 = vpack.c.b16 %v2171, %v2167
        %v2308 = vpack.c.b16 %v2172, %v2168
        %v2309 = vpack.c.b16 %v2173, %v2169
        %v2310 = vpack.c.b16 %v2174, %v2170
        %v2311 = vpack.c.b16 %v2179, %v2175
        %v2312 = vpack.c.b16 %v2180, %v2176
        %v2313 = vpack.c.b16 %v2181, %v2177
        %v2314 = vpack.c.b16 %v2182, %v2178
        %v2315 = vpack.c.b16 %v2187, %v2183
        %v2316 = vpack.c.b16 %v2188, %v2184
        %v2317 = vpack.c.b16 %v2189, %v2185
        %v2318 = vpack.c.b16 %v2190, %v2186
        %2447 = vmatprep.subr.bf16.mxu0 %v2220
        %2448 = vmatpush1.bf16.msra.mxu0 %v2219
        %2449 = vmatprep.subr.bf16.mxu0 %v2216
        %2450 = vmatpush1.bf16.msra.mxu0 %v2215
        %2451 = vmatprep.subr.bf16.mxu0 %v2212
        %2452 = vmatpush1.bf16.msra.mxu0 %v2211
        %2453 = vmatprep.subr.bf16.mxu0 %v2208
        %2454 = vmatpush1.bf16.msra.mxu0 %v2207
        %2455 = vmatprep.subr.bf16.mxu0 %v2204
        %2456 = vmatpush1.bf16.msra.mxu0 %v2203
        %2457 = vmatprep.subr.bf16.mxu0 %v2200
        %2458 = vmatpush1.bf16.msra.mxu0 %v2199
        %2459 = vmatprep.subr.bf16.mxu0 %v2196
        %2460 = vmatpush1.bf16.msra.mxu0 %v2195
        %2461 = vmatprep.subr.bf16.mxu0 %v2192
        %2462 = vmatpush1.bf16.msra.mxu0 %v2191
        %2463 = vmatprep.subr.bf16.mxu0 %v2252
        %2464 = vmatpush2.bf16.msra.mxu0 %v2251
        %2465 = vmatprep.subr.bf16.mxu0 %v2248
        %2466 = vmatpush2.bf16.msra.mxu0 %v2247
        %2467 = vmatprep.subr.bf16.mxu0 %v2244
        %2468 = vmatpush2.bf16.msra.mxu0 %v2243
        %2469 = vmatprep.subr.bf16.mxu0 %v2240
        %2470 = vmatpush2.bf16.msra.mxu0 %v2239
        %2471 = vmatprep.subr.bf16.mxu0 %v2236
        %2472 = vmatpush2.bf16.msra.mxu0 %v2235
        %2473 = vmatprep.subr.bf16.mxu0 %v2232
        %2474 = vmatpush2.bf16.msra.mxu0 %v2231
        %2475 = vmatprep.subr.bf16.mxu0 %v2228
        %2476 = vmatpush2.bf16.msra.mxu0 %v2227
        %2477 = vmatprep.subr.bf16.mxu0 %v2224
        %2478 = vmatpush2.bf16.msra.mxu0 %v2223
        %2479 = vmatprep.mubr.bf16.mxu0 %v1676
        %2480 = vmatmul.mubr.bf16.gmra.mxu0 %v1675
        %v2481 = vpop.f32.mrf.mxu0
        %v2482 = vadd.f32 0.0, %v2481
        %v2483 = vpop.f32.mrf.mxu0
        %v2484 = vadd.f32 0.0, %v2483
        %v2485 = vpop.f32.mrf.mxu0
        %v2486 = vpop.f32.mrf.mxu0
        %2487 = vdwg.mxu0
        %2488 = vmatprep.subr.bf16.mxu0 %v2284
        %2489 = vmatpush1.bf16.msra.mxu0 %v2283
        %2490 = vmatprep.subr.bf16.mxu0 %v2280
        %2491 = vmatpush1.bf16.msra.mxu0 %v2279
        %2492 = vmatprep.subr.bf16.mxu0 %v2276
        %2493 = vmatpush1.bf16.msra.mxu0 %v2275
        %2494 = vmatprep.subr.bf16.mxu0 %v2272
        %2495 = vmatpush1.bf16.msra.mxu0 %v2271
        %2496 = vmatprep.subr.bf16.mxu0 %v2268
        %2497 = vmatpush1.bf16.msra.mxu0 %v2267
        %2498 = vmatprep.subr.bf16.mxu0 %v2264
        %2499 = vmatpush1.bf16.msra.mxu0 %v2263
        %2500 = vmatprep.subr.bf16.mxu0 %v2260
        %2501 = vmatpush1.bf16.msra.mxu0 %v2259
        %2502 = vmatprep.subr.bf16.mxu0 %v2256
        %2503 = vmatpush1.bf16.msra.mxu0 %v2255
        %2504 = vmatprep.subr.bf16.mxu0 %v2316
        %2505 = vmatpush2.bf16.msra.mxu0 %v2315
        %2506 = vmatprep.subr.bf16.mxu0 %v2312
        %2507 = vmatpush2.bf16.msra.mxu0 %v2311
        %2508 = vmatprep.subr.bf16.mxu0 %v2308
        %2509 = vmatpush2.bf16.msra.mxu0 %v2307
        %2510 = vmatprep.subr.bf16.mxu0 %v2304
        %2511 = vmatpush2.bf16.msra.mxu0 %v2303
        %2512 = vmatprep.subr.bf16.mxu0 %v2300
        %2513 = vmatpush2.bf16.msra.mxu0 %v2299
        %2514 = vmatprep.subr.bf16.mxu0 %v2296
        %2515 = vmatpush2.bf16.msra.mxu0 %v2295
        %2516 = vmatprep.subr.bf16.mxu0 %v2292
        %2517 = vmatpush2.bf16.msra.mxu0 %v2291
        %2518 = vmatprep.subr.bf16.mxu0 %v2288
        %2519 = vmatpush2.bf16.msra.mxu0 %v2287
        %2520 = vmatprep.mubr.bf16.mxu0 %v1678
        %2521 = vmatmul.mubr.bf16.gmra.mxu0 %v1677
        %v2522 = vpop.f32.mrf.mxu0
        %v2523 = vadd.f32 %v2482, %v2522
        %v2524 = vpop.f32.mrf.mxu0
        %v2525 = vadd.f32 %v2484, %v2524
        %v2526 = vpop.f32.mrf.mxu0
        %v2527 = vpop.f32.mrf.mxu0
        %2528 = vdwg.mxu0
        %2529 = vmatprep.subr.bf16.mxu0 %v2222
        %2530 = vmatpush1.bf16.msra.mxu0 %v2221
        %2531 = vmatprep.subr.bf16.mxu0 %v2218
        %2532 = vmatpush1.bf16.msra.mxu0 %v2217
        %2533 = vmatprep.subr.bf16.mxu0 %v2214
        %2534 = vmatpush1.bf16.msra.mxu0 %v2213
        %2535 = vmatprep.subr.bf16.mxu0 %v2210
        %2536 = vmatpush1.bf16.msra.mxu0 %v2209
        %2537 = vmatprep.subr.bf16.mxu0 %v2206
        %2538 = vmatpush1.bf16.msra.mxu0 %v2205
        %2539 = vmatprep.subr.bf16.mxu0 %v2202
        %2540 = vmatpush1.bf16.msra.mxu0 %v2201
        %2541 = vmatprep.subr.bf16.mxu0 %v2198
        %2542 = vmatpush1.bf16.msra.mxu0 %v2197
        %2543 = vmatprep.subr.bf16.mxu0 %v2194
        %2544 = vmatpush1.bf16.msra.mxu0 %v2193
        %2545 = vmatprep.subr.bf16.mxu0 %v2254
        %2546 = vmatpush2.bf16.msra.mxu0 %v2253
        %2547 = vmatprep.subr.bf16.mxu0 %v2250
        %2548 = vmatpush2.bf16.msra.mxu0 %v2249
        %2549 = vmatprep.subr.bf16.mxu0 %v2246
        %2550 = vmatpush2.bf16.msra.mxu0 %v2245
        %2551 = vmatprep.subr.bf16.mxu0 %v2242
        %2552 = vmatpush2.bf16.msra.mxu0 %v2241
        %2553 = vmatprep.subr.bf16.mxu0 %v2238
        %2554 = vmatpush2.bf16.msra.mxu0 %v2237
        %2555 = vmatprep.subr.bf16.mxu0 %v2234
        %2556 = vmatpush2.bf16.msra.mxu0 %v2233
        %2557 = vmatprep.subr.bf16.mxu0 %v2230
        %2558 = vmatpush2.bf16.msra.mxu0 %v2229
        %2559 = vmatprep.subr.bf16.mxu0 %v2226
        %2560 = vmatpush2.bf16.msra.mxu0 %v2225
        %2561 = vmatprep.mubr.bf16.mxu0 %v1676
        %2562 = vmatmul.mubr.bf16.gmra.mxu0 %v1675
        %v2563 = vpop.f32.mrf.mxu0
        %v2564 = vadd.f32 0.0, %v2563
        %v2565 = vpop.f32.mrf.mxu0
        %v2566 = vadd.f32 0.0, %v2565
        %v2567 = vpop.f32.mrf.mxu0
        %v2568 = vpop.f32.mrf.mxu0
        %2569 = vdwg.mxu0
        %2570 = vmatprep.subr.bf16.mxu0 %v2286
        %2571 = vmatpush1.bf16.msra.mxu0 %v2285
        %2572 = vmatprep.subr.bf16.mxu0 %v2282
        %2573 = vmatpush1.bf16.msra.mxu0 %v2281
        %2574 = vmatprep.subr.bf16.mxu0 %v2278
        %2575 = vmatpush1.bf16.msra.mxu0 %v2277
        %2576 = vmatprep.subr.bf16.mxu0 %v2274
        %2577 = vmatpush1.bf16.msra.mxu0 %v2273
        %2578 = vmatprep.subr.bf16.mxu0 %v2270
        %2579 = vmatpush1.bf16.msra.mxu0 %v2269
        %2580 = vmatprep.subr.bf16.mxu0 %v2266
        %2581 = vmatpush1.bf16.msra.mxu0 %v2265
        %2582 = vmatprep.subr.bf16.mxu0 %v2262
        %2583 = vmatpush1.bf16.msra.mxu0 %v2261
        %2584 = vmatprep.subr.bf16.mxu0 %v2258
        %2585 = vmatpush1.bf16.msra.mxu0 %v2257
        %2586 = vmatprep.subr.bf16.mxu0 %v2318
        %2587 = vmatpush2.bf16.msra.mxu0 %v2317
        %2588 = vmatprep.subr.bf16.mxu0 %v2314
        %2589 = vmatpush2.bf16.msra.mxu0 %v2313
        %2590 = vmatprep.subr.bf16.mxu0 %v2310
        %2591 = vmatpush2.bf16.msra.mxu0 %v2309
        %2592 = vmatprep.subr.bf16.mxu0 %v2306
        %2593 = vmatpush2.bf16.msra.mxu0 %v2305
        %2594 = vmatprep.subr.bf16.mxu0 %v2302
        %2595 = vmatpush2.bf16.msra.mxu0 %v2301
        %2596 = vmatprep.subr.bf16.mxu0 %v2298
        %2597 = vmatpush2.bf16.msra.mxu0 %v2297
        %2598 = vmatprep.subr.bf16.mxu0 %v2294
        %2599 = vmatpush2.bf16.msra.mxu0 %v2293
        %2600 = vmatprep.subr.bf16.mxu0 %v2290
        %2601 = vmatpush2.bf16.msra.mxu0 %v2289
        %2602 = vmatprep.mubr.bf16.mxu0 %v1678
        %2603 = vmatmul.mubr.bf16.gmra.mxu0 %v1677
        %v2604 = vpop.f32.mrf.mxu0
        %v2605 = vadd.f32 %v2564, %v2604
        %v2606 = vpop.f32.mrf.mxu0
        %v2607 = vadd.f32 %v2566, %v2606
        %v2608 = vpop.f32.mrf.mxu0
        %v2609 = vpop.f32.mrf.mxu0
        %2610 = vdwg.mxu0
        %v2615 = vcombine.low %v2523, %v2525
        %v2616 = vcombine.low %v2605, %v2607
        %v2618 = vunpack.c.l.s4 1983009808
        %v2619 = vunpack.c.0.s8 %v2618
        %v2620 = vlaneseq
        %v2621 = vshrl.u32 %v2620, 7
        %v2622 = vsub.s32 %v2619, %v2621
        %v2623 = vrot.slane %v2615, %v2622
        %v2625 = vunpack.c.l.s4 1983009808
        %v2626 = vunpack.c.0.s8 %v2625
        %v2627 = vlaneseq
        %v2628 = vshrl.u32 %v2627, 7
        %v2629 = vsub.s32 %v2626, %v2628
        %v2630 = vrot.slane %v2616, %v2629
        %v2631 = vcombine.low %v2623, %v2630
        %v2633 = vadd.f32 %v1674, %v2631
        %2634 = vst [vmem:[#allocation3] sm:$0xff] %v2633
        %p2635 = scmp.eq.s32.totalorder %s25, 2
        // Predicated region
        $region69: #{efficientnet_b3_arcface_forward.1} parent=55 // pred_check
          %p2636 = pneg %p2635
        $region70: #{efficientnet_b3_arcface_forward.1} parent=55 // pred_check_branch
          %2638 = sbr.rel (%p2636) target = $region72
        $region71: #{efficientnet_b3_arcface_forward.1} parent=55 // pred_region
          %v2639 = vld [vmem:[#allocation3] sm:$0xff]
          %v2640 = vld [vmem:[%s7] sm:$0xf]
          %v2642 = vlaneseq
          %v2643 = vshrl.u32 %v2642, 7
          %v2644 = vsub.s32 0, %v2643
          %v2645 = vrot.slane %v2640, %v2644
          %v2646 = vlaneseq
          %v2647 = vshrl.u32 %v2646, 7
          %v2648 = vsub.s32 1, %v2647
          %v2649 = vrot.slane %v2640, %v2648
          %v2650 = vlaneseq
          %v2651 = vshrl.u32 %v2650, 7
          %v2652 = vsub.s32 2, %v2651
          %v2653 = vrot.slane %v2640, %v2652
          %v2654 = vlaneseq
          %v2655 = vshrl.u32 %v2654, 7
          %v2656 = vsub.s32 3, %v2655
          %v2657 = vrot.slane %v2640, %v2656
          %v2658 = vcombine.low %v2645, %v2649
          %v2659 = vcombine.low %v2653, %v2657
          %v2661 = vunpack.c.l.s4 1983009808
          %v2662 = vunpack.c.0.s8 %v2661
          %v2663 = vlaneseq
          %v2664 = vshrl.u32 %v2663, 7
          %v2665 = vsub.s32 %v2662, %v2664
          %v2666 = vrot.slane %v2658, %v2665
          %v2668 = vunpack.c.l.s4 1983009808
          %v2669 = vunpack.c.0.s8 %v2668
          %v2670 = vlaneseq
          %v2671 = vshrl.u32 %v2670, 7
          %v2672 = vsub.s32 %v2669, %v2671
          %v2673 = vrot.slane %v2659, %v2672
          %v2674 = vcombine.low %v2666, %v2673
          %v2676 = vadd.f32 %v2639, %v2674
          %v2677 = vmax.f32 %v2676, 0.0
          %v2678 = vmul.f32 %v2677, %v2677
          %v2680 = vcombine.high %v2678, %v2678
          %v2682 = vunpack.c.l.s4 1983009808
          %v2683 = vunpack.c.0.s8 %v2682
          %v2684 = vlaneseq
          %v2685 = vshrl.u32 %v2684, 7
          %v2686 = vsub.s32 %v2683, %v2685
          %v2687 = vrot.slane %v2678, %v2686
          %v2689 = vunpack.c.l.s4 1983009808
          %v2690 = vunpack.c.0.s8 %v2689
          %v2691 = vlaneseq
          %v2692 = vshrl.u32 %v2691, 7
          %v2693 = vsub.s32 %v2690, %v2692
          %v2694 = vrot.slane %v2680, %v2693
          %v2695 = vcombine.high %v2687, %v2687
          %v2696 = vcombine.high %v2694, %v2694
          %vm2701 = vcmask 1041408
          %v2702 = vsel %vm2701, %v2687, 0.0
          %v2703 = vsel %vm2701, %v2695, 0.0
          %v2704 = vadd.f32 %v2702, %v2703
          %v2705 = vsel %vm2701, %v2694, 0.0
          %v2706 = vadd.f32 %v2704, %v2705
          %v2707 = vsel %vm2701, %v2696, 0.0
          %v2708 = vadd.f32 %v2706, %v2707
          %2709 = vadd.xlane.f32.xlu0 %v2708
          %v2710 = vpop.xlane.xlu0 %2709
          %v2711 = vmax.f32 %v2710, 1e-24
          %v2712 = vrsqrt.pop %v2711
          %v2715 = vunpack.c.l.s4 269488144
          %v2716 = vunpack.c.0.s8 %v2715
          %v2717 = vlaneseq
          %v2718 = vshrl.u32 %v2717, 7
          %v2719 = vsub.s32 %v2716, %v2718
          %v2720 = vrot.slane %v2712, %v2719
          %v2722 = vmul.f32 %v2677, %v2720
          %v2723 = vld [vmem:[#allocation7] sm:$0xff]
          %v2724 = vld [vmem:[#allocation7 + $0x8] sm:$0xff]
          %v2725 = vld [vmem:[#allocation7 + $0x10] sm:$0xff]
          %v2726 = vld [vmem:[#allocation7 + $0x18] sm:$0xff]
          %v2727 = vld [vmem:[#allocation7 + $0x20] sm:$0xff]
          %v2728 = vld [vmem:[#allocation7 + $0x28] sm:$0xff]
          %v2729 = vld [vmem:[#allocation7 + $0x30] sm:$0xff]
          %v2730 = vld [vmem:[#allocation7 + $0x38] sm:$0xff]
          %v2731 = vld [vmem:[#allocation7 + $0x40] sm:$0xff]
          %v2732 = vld [vmem:[#allocation7 + $0x48] sm:$0xff]
          %v2733 = vld [vmem:[#allocation7 + $0x50] sm:$0xff]
          %v2734 = vld [vmem:[#allocation7 + $0x58] sm:$0xff]
          %v2735 = vld [vmem:[#allocation7 + $0x60] sm:$0xff]
          %v2736 = vld [vmem:[#allocation7 + $0x68] sm:$0xff]
          %v2737 = vld [vmem:[#allocation7 + $0x70] sm:$0xff]
          %v2738 = vld [vmem:[#allocation7 + $0x78] sm:$0xff]
          %v2739 = vld [vmem:[#allocation7 + $0x80] sm:$0xff]
          %v2740 = vld [vmem:[#allocation7 + $0x88] sm:$0xff]
          %v2741 = vld [vmem:[#allocation7 + $0x90] sm:$0xff]
          %v2742 = vld [vmem:[#allocation7 + $0x98] sm:$0xff]
          %v2743 = vld [vmem:[#allocation7 + $0xa0] sm:$0xff]
          %v2744 = vld [vmem:[#allocation7 + $0xa8] sm:$0xff]
          %v2745 = vld [vmem:[#allocation7 + $0xb0] sm:$0xff]
          %v2746 = vld [vmem:[#allocation7 + $0xb8] sm:$0xff]
          %v2747 = vld [vmem:[#allocation7 + $0xc0] sm:$0xff]
          %v2748 = vld [vmem:[#allocation7 + $0xc8] sm:$0xff]
          %v2749 = vld [vmem:[#allocation7 + $0xd0] sm:$0xff]
          %v2750 = vld [vmem:[#allocation7 + $0xd8] sm:$0xff]
          %v2751 = vld [vmem:[#allocation7 + $0xe0] sm:$0xff]
          %v2752 = vld [vmem:[#allocation7 + $0xe8] sm:$0xff]
          %v2753 = vld [vmem:[#allocation7 + $0xf0] sm:$0xff]
          %v2754 = vld [vmem:[#allocation7 + $0xf8] sm:$0xff]
          %v2755 = vld [vmem:[#allocation7 + $0x100] sm:$0xff]
          %v2756 = vld [vmem:[#allocation7 + $0x108] sm:$0xff]
          %v2757 = vld [vmem:[#allocation7 + $0x110] sm:$0xff]
          %v2758 = vld [vmem:[#allocation7 + $0x118] sm:$0xff]
          %v2759 = vld [vmem:[#allocation7 + $0x120] sm:$0xff]
          %v2760 = vld [vmem:[#allocation7 + $0x128] sm:$0xff]
          %v2761 = vld [vmem:[#allocation7 + $0x130] sm:$0xff]
          %v2762 = vld [vmem:[#allocation7 + $0x138] sm:$0xff]
          %v2763 = vld [vmem:[#allocation7 + $0x140] sm:$0xff]
          %v2764 = vld [vmem:[#allocation7 + $0x148] sm:$0xff]
          %v2765 = vld [vmem:[#allocation7 + $0x150] sm:$0xff]
          %v2766 = vld [vmem:[#allocation7 + $0x158] sm:$0xff]
          %v2767 = vld [vmem:[#allocation7 + $0x160] sm:$0xff]
          %v2768 = vld [vmem:[#allocation7 + $0x168] sm:$0xff]
          %v2769 = vld [vmem:[#allocation7 + $0x170] sm:$0xff]
          %v2770 = vld [vmem:[#allocation7 + $0x178] sm:$0xff]
          %v2771 = vld [vmem:[#allocation7 + $0x180] sm:$0xff]
          %v2772 = vld [vmem:[#allocation7 + $0x188] sm:$0xff]
          %v2773 = vld [vmem:[#allocation7 + $0x190] sm:$0xff]
          %v2774 = vld [vmem:[#allocation7 + $0x198] sm:$0xff]
          %v2775 = vld [vmem:[#allocation7 + $0x1a0] sm:$0xff]
          %v2776 = vld [vmem:[#allocation7 + $0x1a8] sm:$0xff]
          %v2777 = vld [vmem:[#allocation7 + $0x1b0] sm:$0xff]
          %v2778 = vld [vmem:[#allocation7 + $0x1b8] sm:$0xff]
          %v2779 = vld [vmem:[#allocation7 + $0x1c0] sm:$0xff]
          %v2780 = vld [vmem:[#allocation7 + $0x1c8] sm:$0xff]
          %v2781 = vld [vmem:[#allocation7 + $0x1d0] sm:$0xff]
          %v2782 = vld [vmem:[#allocation7 + $0x1d8] sm:$0xff]
          %v2783 = vld [vmem:[#allocation7 + $0x1e0] sm:$0xff]
          %v2784 = vld [vmem:[#allocation7 + $0x1e8] sm:$0xff]
          %v2785 = vld [vmem:[#allocation7 + $0x1f0] sm:$0xff]
          %v2786 = vld [vmem:[#allocation7 + $0x1f8] sm:$0xff]
          %v2788 = vcombine.high %v2722, %v2722
          %v2790 = vunpack.c.l.s4 1983009808
          %v2791 = vunpack.c.0.s8 %v2790
          %v2792 = vlaneseq
          %v2793 = vshrl.u32 %v2792, 7
          %v2794 = vsub.s32 %v2791, %v2793
          %v2795 = vrot.slane %v2722, %v2794
          %v2797 = vunpack.c.l.s4 1983009808
          %v2798 = vunpack.c.0.s8 %v2797
          %v2799 = vlaneseq
          %v2800 = vshrl.u32 %v2799, 7
          %v2801 = vsub.s32 %v2798, %v2800
          %v2802 = vrot.slane %v2788, %v2801
          %v2803 = vcombine.high %v2795, %v2795
          %v2804 = vcombine.high %v2802, %v2802
          %2809 = vmatprep.subr.mxu0 0.0
          %2810 = vmatpush1.msra.mxu0 %v2738
          %2811 = vmatprep.subr.mxu0 0.0
          %2812 = vmatpush1.msra.mxu0 %v2737
          %2813 = vmatprep.subr.mxu0 0.0
          %2814 = vmatpush1.msra.mxu0 %v2736
          %2815 = vmatprep.subr.mxu0 0.0
          %2816 = vmatpush1.msra.mxu0 %v2735
          %2817 = vmatprep.subr.mxu0 0.0
          %2818 = vmatpush1.msra.mxu0 %v2734
          %2819 = vmatprep.subr.mxu0 0.0
          %2820 = vmatpush1.msra.mxu0 %v2733
          %2821 = vmatprep.subr.mxu0 0.0
          %2822 = vmatpush1.msra.mxu0 %v2732
          %2823 = vmatprep.subr.mxu0 0.0
          %2824 = vmatpush1.msra.mxu0 %v2731
          %2825 = vmatprep.subr.mxu0 0.0
          %2826 = vmatpush1.msra.mxu0 %v2730
          %2827 = vmatprep.subr.mxu0 0.0
          %2828 = vmatpush1.msra.mxu0 %v2729
          %2829 = vmatprep.subr.mxu0 0.0
          %2830 = vmatpush1.msra.mxu0 %v2728
          %2831 = vmatprep.subr.mxu0 0.0
          %2832 = vmatpush1.msra.mxu0 %v2727
          %2833 = vmatprep.subr.mxu0 0.0
          %2834 = vmatpush1.msra.mxu0 %v2726
          %2835 = vmatprep.subr.mxu0 0.0
          %2836 = vmatpush1.msra.mxu0 %v2725
          %2837 = vmatprep.subr.mxu0 0.0
          %2838 = vmatpush1.msra.mxu0 %v2724
          %2839 = vmatprep.subr.mxu0 0.0
          %2840 = vmatpush1.msra.mxu0 %v2723
          %2841 = vmatprep.subr.mxu0 0.0
          %2842 = vmatpush2.msra.mxu0 %v2754
          %2843 = vmatprep.subr.mxu0 0.0
          %2844 = vmatpush2.msra.mxu0 %v2753
          %2845 = vmatprep.subr.mxu0 0.0
          %2846 = vmatpush2.msra.mxu0 %v2752
          %2847 = vmatprep.subr.mxu0 0.0
          %2848 = vmatpush2.msra.mxu0 %v2751
          %2849 = vmatprep.subr.mxu0 0.0
          %2850 = vmatpush2.msra.mxu0 %v2750
          %2851 = vmatprep.subr.mxu0 0.0
          %2852 = vmatpush2.msra.mxu0 %v2749
          %2853 = vmatprep.subr.mxu0 0.0
          %2854 = vmatpush2.msra.mxu0 %v2748
          %2855 = vmatprep.subr.mxu0 0.0
          %2856 = vmatpush2.msra.mxu0 %v2747
          %2857 = vmatprep.subr.mxu0 0.0
          %2858 = vmatpush2.msra.mxu0 %v2746
          %2859 = vmatprep.subr.mxu0 0.0
          %2860 = vmatpush2.msra.mxu0 %v2745
          %2861 = vmatprep.subr.mxu0 0.0
          %2862 = vmatpush2.msra.mxu0 %v2744
          %2863 = vmatprep.subr.mxu0 0.0
          %2864 = vmatpush2.msra.mxu0 %v2743
          %2865 = vmatprep.subr.mxu0 0.0
          %2866 = vmatpush2.msra.mxu0 %v2742
          %2867 = vmatprep.subr.mxu0 0.0
          %2868 = vmatpush2.msra.mxu0 %v2741
          %2869 = vmatprep.subr.mxu0 0.0
          %2870 = vmatpush2.msra.mxu0 %v2740
          %2871 = vmatprep.subr.mxu0 0.0
          %2872 = vmatpush2.msra.mxu0 %v2739
          %2873 = vmatprep.mubr.f32.mxu0 %v2803
          %2874 = vmatmul.mubr.f32.gmra.mxu0 %v2795
          %v2875 = vpop.f32.mrf.mxu0
          %v2876 = vadd.f32 0.0, %v2875
          %v2877 = vpop.f32.mrf.mxu0
          %2878 = vdwg.mxu0
          %2879 = vmatprep.subr.mxu0 0.0
          %2880 = vmatpush1.msra.mxu0 %v2770
          %2881 = vmatprep.subr.mxu0 0.0
          %2882 = vmatpush1.msra.mxu0 %v2769
          %2883 = vmatprep.subr.mxu0 0.0
          %2884 = vmatpush1.msra.mxu0 %v2768
          %2885 = vmatprep.subr.mxu0 0.0
          %2886 = vmatpush1.msra.mxu0 %v2767
          %2887 = vmatprep.subr.mxu0 0.0
          %2888 = vmatpush1.msra.mxu0 %v2766
          %2889 = vmatprep.subr.mxu0 0.0
          %2890 = vmatpush1.msra.mxu0 %v2765
          %2891 = vmatprep.subr.mxu0 0.0
          %2892 = vmatpush1.msra.mxu0 %v2764
          %2893 = vmatprep.subr.mxu0 0.0
          %2894 = vmatpush1.msra.mxu0 %v2763
          %2895 = vmatprep.subr.mxu0 0.0
          %2896 = vmatpush1.msra.mxu0 %v2762
          %2897 = vmatprep.subr.mxu0 0.0
          %2898 = vmatpush1.msra.mxu0 %v2761
          %2899 = vmatprep.subr.mxu0 0.0
          %2900 = vmatpush1.msra.mxu0 %v2760
          %2901 = vmatprep.subr.mxu0 0.0
          %2902 = vmatpush1.msra.mxu0 %v2759
          %2903 = vmatprep.subr.mxu0 0.0
          %2904 = vmatpush1.msra.mxu0 %v2758
          %2905 = vmatprep.subr.mxu0 0.0
          %2906 = vmatpush1.msra.mxu0 %v2757
          %2907 = vmatprep.subr.mxu0 0.0
          %2908 = vmatpush1.msra.mxu0 %v2756
          %2909 = vmatprep.subr.mxu0 0.0
          %2910 = vmatpush1.msra.mxu0 %v2755
          %2911 = vmatprep.subr.mxu0 0.0
          %2912 = vmatpush2.msra.mxu0 %v2786
          %2913 = vmatprep.subr.mxu0 0.0
          %2914 = vmatpush2.msra.mxu0 %v2785
          %2915 = vmatprep.subr.mxu0 0.0
          %2916 = vmatpush2.msra.mxu0 %v2784
          %2917 = vmatprep.subr.mxu0 0.0
          %2918 = vmatpush2.msra.mxu0 %v2783
          %2919 = vmatprep.subr.mxu0 0.0
          %2920 = vmatpush2.msra.mxu0 %v2782
          %2921 = vmatprep.subr.mxu0 0.0
          %2922 = vmatpush2.msra.mxu0 %v2781
          %2923 = vmatprep.subr.mxu0 0.0
          %2924 = vmatpush2.msra.mxu0 %v2780
          %2925 = vmatprep.subr.mxu0 0.0
          %2926 = vmatpush2.msra.mxu0 %v2779
          %2927 = vmatprep.subr.mxu0 0.0
          %2928 = vmatpush2.msra.mxu0 %v2778
          %2929 = vmatprep.subr.mxu0 0.0
          %2930 = vmatpush2.msra.mxu0 %v2777
          %2931 = vmatprep.subr.mxu0 0.0
          %2932 = vmatpush2.msra.mxu0 %v2776
          %2933 = vmatprep.subr.mxu0 0.0
          %2934 = vmatpush2.msra.mxu0 %v2775
          %2935 = vmatprep.subr.mxu0 0.0
          %2936 = vmatpush2.msra.mxu0 %v2774
          %2937 = vmatprep.subr.mxu0 0.0
          %2938 = vmatpush2.msra.mxu0 %v2773
          %2939 = vmatprep.subr.mxu0 0.0
          %2940 = vmatpush2.msra.mxu0 %v2772
          %2941 = vmatprep.subr.mxu0 0.0
          %2942 = vmatpush2.msra.mxu0 %v2771
          %2943 = vmatprep.mubr.f32.mxu0 %v2804
          %2944 = vmatmul.mubr.f32.gmra.mxu0 %v2802
          %v2945 = vpop.f32.mrf.mxu0
          %v2946 = vadd.f32 %v2876, %v2945
          %v2947 = vpop.f32.mrf.mxu0
          %2948 = vdwg.mxu0
          %v2949 = vmul.f32 %v2946, 30.0
          %2950 = vst [vmem:[#allocation9] sm:$0x3] %v2949
        $region72: #{efficientnet_b3_arcface_forward.1} parent=55 // pred_fallthru
          _
        // Predicated region
        $region73: #{efficientnet_b3_arcface_forward.1} parent=55 // pred_check
          %p2951 = pneg %p242
        $region74: #{efficientnet_b3_arcface_forward.1} parent=55 // pred_check_branch
          %2953 = sbr.rel (%p2951) target = $region76
        $region75: #{efficientnet_b3_arcface_forward.1} parent=55 // pred_region
          %s2955 = ssub.s32 32, 32
          %2956 = vsyncadd [#allocation6], %s2955
          %s2958 = sshll.u32 [#allocation9], 4
          %s2959 = int_to_ptr.vmem [resolvable:$true] %s2958
          %2961 = dma.vmem_to_hbm [thread:$0]  %s2959, 32, %s9, [#allocation6]
        $region76: #{efficientnet_b3_arcface_forward.1} parent=55 // pred_fallthru
          _
        // Predicated region
        $region77: #{efficientnet_b3_arcface_forward.1} parent=55 // pred_check
          %p2962 = pneg %p242
        $region78: #{efficientnet_b3_arcface_forward.1} parent=55 // pred_check_branch
          %2964 = sbr.rel (%p2962) target = $region80
        $region79: #{efficientnet_b3_arcface_forward.1} parent=55 // pred_region
          %2965 = dma.done [#allocation6], 32
        $region80: #{efficientnet_b3_arcface_forward.1} parent=55 // pred_fallthru
          _
      $region56: #{efficientnet_b3_arcface_forward.1} parent=5 // pred_fallthru
        _
      %p2966 = scmp.le.s32.totalorder 2, %s20
      // Predicated region
      $region81: #{efficientnet_b3_arcface_forward.1} parent=5 // pred_check
        %p2967 = pneg %p2966
      $region82: #{efficientnet_b3_arcface_forward.1} parent=5 // pred_check_branch
        %2969 = sbr.rel (%p2967) target = $region84
      $region83: #{efficientnet_b3_arcface_forward.1} parent=5 // pred_region
        %s2970 = ssub.s32 %s20, 2
      $region84: #{efficientnet_b3_arcface_forward.1} parent=5 // pred_fallthru
        _
    $region6: #{efficientnet_b3_arcface_forward.1} parent=1 // loop_footer
      %s24 = sadd.s32 1, %s20
    $region7: #{efficientnet_b3_arcface_forward.1} parent=1 // loop_footer_branch
      %19 = sbr.rel target = $region3
    $region8: #{efficientnet_b3_arcface_forward.1} parent=1 // loop_exit
      _
    %2971 = vsyncpa [#allocation5], 1
    %s2972 = scalar_lea.sflag [#allocation5], 1
    %2973 = vsyncpa %s2972, 1
    %2974 = vsyncpa [#allocation8], 1
    %2975 = vsyncpa [#allocation6], 1
    %s2976 = scalar_lea.sflag [#allocation6], 1
    %2977 = vsyncpa %s2976, 1

</llo_original>
